<compile_context>
chip_gen: v7x
topology: tpu7x:2x2x1
jax: 0.10.0
libtpu: 0.0.40
codegen_flags: <defaults>
</compile_context>

<pallas_src>
import math
import functools

import jax
import jax.numpy as jnp
from jax import lax
from jax.experimental import pallas as pl
from jax.experimental.pallas import tpu as pltpu


# Explicit scoped-VMEM limit.  Review guidance: <= ~48 MiB so a v6e-sized
# tiling cannot silently blow v7x's 64 MiB-per-TensorCore budget; actual
# working sets below stay well under this.
VMEM_LIMIT_BYTES = 48 * 1024 * 1024
_Q_TILE_CAP = 256      # query-row tile cap (sublane dim, multiple of 8)
_KV_TILE_CAP = 512     # key/value tile cap (lane/sublane dim, multiple of 128)
_ROW_TILE_CAP = 256    # row tile cap for the fused output projection


def _row_tile(dim, cap):
    """Largest tile <= cap dividing `dim` that is a multiple of 8 (else full dim)."""
    if dim <= cap:
        return dim
    t = (cap // 8) * 8
    while t >= 8:
        if dim % t == 0:
            return t
        t -= 8
    return dim


def _seq_tile(dim, cap):
    """Largest tile <= cap dividing `dim` that is a multiple of 128 (else full dim)."""
    if dim <= cap:
        return dim
    t = (cap // 128) * 128
    while t >= 128:
        if dim % t == 0:
            return t
        t -= 128
    return dim


# ----------------------------------------------------------------------------
# Pallas kernels
# ----------------------------------------------------------------------------
def qkv_proj_kernel(x_ref, w_ref, b_ref, o_ref, *, n_heads, head_dim):
    """Fused QKV projection for one (batch, row-tile):  y = x @ W_qkv + b_qkv.

    x_ref: (1, tq, H) f32        w_ref: (H, 3H) bf16 (resident, Q-cols pre-scaled)
    b_ref: (1, 3H) f32           o_ref: (3, 1, nH, tq, Dh) bf16 (head-major)
    One wide MXU matmul per step (N = 3H); heads are split only on the store
    side with static lane slices.
    """
    x = x_ref[0].astype(jnp.bfloat16)                            # (tq, H)
    y = jnp.dot(x, w_ref[...], preferred_element_type=jnp.float32)  # (tq, 3H) f32
    y = (y + b_ref[...]).astype(o_ref.dtype)                     # (tq, 3H) bf16
    # TODO(synk): head-major HBM layout keeps the attention reader trivial but
    # makes these stores 64-lane; a >=128-lane QKV layout would need an
    # in-kernel head transpose on the attention side.
    for t in range(3):
        for h in range(n_heads):
            c0 = (t * n_heads + h) * head_dim
            o_ref[t, 0, h] = y[:, c0:c0 + head_dim]


def flash_attention_kernel(q_ref, k_ref, v_ref, bias_ref, o_ref,
                           m_sc, l_sc, acc_sc):
    """Flash-style attention over one (batch, q-tile): all heads per step.

    q_ref: (1, 1, nH, tq, Dh) bf16 (Q already scaled by 1/sqrt(Dh))
    k_ref/v_ref: (1, 1, nH, tkv, Dh) bf16
    bias_ref: (1, 1, tkv) f32 additive key mask (0 valid / -1e30 masked)
    o_ref: (1, tq, H) bf16 (heads merged, lane-dense)
    scratch: m_sc/l_sc (nH, tq, 1) f32, acc_sc (nH, tq, Dh) f32
    """
    ki = pl.program_id(2)
    n_kv = pl.num_programs(2)

    @pl.when(ki == 0)
    def _():
        m_sc[...] = jnp.full(m_sc.shape, -jnp.inf, m_sc.dtype)
        l_sc[...] = jnp.zeros(l_sc.shape, l_sc.dtype)
        acc_sc[...] = jnp.zeros(acc_sc.shape, acc_sc.dtype)

    q = q_ref[0, 0]                          # (nH, tq, Dh)  bf16
    k = k_ref[0, 0]                          # (nH, tkv, Dh) bf16
    v = v_ref[0, 0]                          # (nH, tkv, Dh) bf16
    bias = bias_ref[0]                       # (1, tkv)      f32

    s = jnp.einsum("hqd,hkd->hqk", q, k,
                   preferred_element_type=jnp.float32)            # (nH, tq, tkv)
    s = s + bias                                                  # additive key mask

    m_prev = m_sc[...]
    m_new = jnp.maximum(m_prev, jnp.max(s, axis=-1, keepdims=True))
    alpha = jnp.exp(m_prev - m_new)
    p = jnp.exp(s - m_new)                                        # f32
    l_sc[...] = alpha * l_sc[...] + jnp.sum(p, axis=-1, keepdims=True)
    # TODO(synk): attention-prob dropout (StableDropout) omitted -> eval mode.
    pv = jnp.einsum("hqk,hkd->hqd", p.astype(v.dtype), v,
                    preferred_element_type=jnp.float32)           # (nH, tq, Dh)
    acc_sc[...] = alpha * acc_sc[...] + pv
    m_sc[...] = m_new

    @pl.when(ki == n_kv - 1)
    def _():
        inv_l = pl.reciprocal(l_sc[...], approx=True)             # EUP, ~free
        ctx = acc_sc[...] * inv_l                                 # (nH, tq, Dh) f32
        n_heads, _, head_dim = ctx.shape
        # Merge heads into the lane-dense (tq, H) output block (once per q-tile).
        for h in range(n_heads):                                  # static unroll
            o_ref[0, :, h * head_dim:(h + 1) * head_dim] = ctx[h].astype(o_ref.dtype)


def self_output_kernel(h_ref, w_ref, b_ref, res_ref, g_ref, beta_ref, o_ref, *, eps):
    """Row tile of: dense -> (+ residual) -> LayerNorm, fused.

    h_ref: (tm, H) bf16   w_ref: (H, H) bf16 (resident)   rest f32.
    """
    h = h_ref[...]
    w = w_ref[...]
    y = jnp.dot(h, w, preferred_element_type=jnp.float32)
    y = y + b_ref[...]
    # TODO(synk): hidden-state dropout (StableDropout) omitted -> eval mode.
    y = y + res_ref[...].astype(jnp.float32)
    mean = jnp.mean(y, axis=-1, keepdims=True)
    c = y - mean
    var = jnp.mean(c * c, axis=-1, keepdims=True)
    y = c * lax.rsqrt(var + jnp.float32(eps))
    o_ref[...] = (y * g_ref[...] + beta_ref[...]).astype(o_ref.dtype)


# ----------------------------------------------------------------------------
# pallas_call wrappers
# ----------------------------------------------------------------------------
def pallas_qkv_projection(x, w_qkv, b_qkv, n_heads):
    """x: [B,S,H] f32; w_qkv: [H,3H] bf16 (Q pre-scaled); b_qkv: [1,3H] f32
       -> qkv_heads: [3,B,nH,S,Dh] bf16 (head-major)."""
    B, S, H = x.shape
    Dh = H // n_heads
    tq = _row_tile(S, _Q_TILE_CAP)
    grid = (B, S // tq)
    kernel = functools.partial(qkv_proj_kernel, n_heads=n_heads, head_dim=Dh)
    return pl.pallas_call(
        kernel,
        out_shape=jax.ShapeDtypeStruct((3, B, n_heads, S, Dh), jnp.bfloat16),
        grid=grid,
        in_specs=[
            pl.BlockSpec((1, tq, H), lambda b, s: (b, s, 0)),
            pl.BlockSpec((H, 3 * H), lambda b, s: (0, 0)),   # resident weight
            pl.BlockSpec((1, 3 * H), lambda b, s: (0, 0)),   # resident bias
        ],
        out_specs=pl.BlockSpec((3, 1, n_heads, tq, Dh), lambda b, s: (0, b, 0, s, 0)),
        compiler_params=pltpu.CompilerParams(
            dimension_semantics=("parallel", "parallel"),
            vmem_limit_bytes=VMEM_LIMIT_BYTES),
    )(x, w_qkv, b_qkv)


def pallas_flash_attention(qkv_heads, mask_bias):
    """qkv_heads: [3,B,nH,S,Dh] bf16; mask_bias: [B,1,S] f32 additive
       -> [B,S,H] bf16 (heads merged)."""
    _, B, nH, S, Dh = qkv_heads.shape
    H = nH * Dh
    tq = _row_tile(S, _Q_TILE_CAP)
    tkv = _seq_tile(S, _KV_TILE_CAP)
    grid = (B, S // tq, S // tkv)

    q_spec = pl.BlockSpec((1, 1, nH, tq, Dh), lambda b, qi, ki: (0, b, 0, qi, 0))
    k_spec = pl.BlockSpec((1, 1, nH, tkv, Dh), lambda b, qi, ki: (1, b, 0, ki, 0))
    v_spec = pl.BlockSpec((1, 1, nH, tkv, Dh), lambda b, qi, ki: (2, b, 0, ki, 0))
    m_spec = pl.BlockSpec((1, 1, tkv), lambda b, qi, ki: (b, 0, ki))
    o_spec = pl.BlockSpec((1, tq, H), lambda b, qi, ki: (b, qi, 0))

    # TODO(synk): on v5e/v6e (128 MiB VMEM) a K/V-resident variant (full-S K/V
    # blocks + in-kernel kv loop) would cut K/V HBM re-streaming by S/tq; the
    # tiled kv grid axis is kept as the v7x-safe default.
    return pl.pallas_call(
        flash_attention_kernel,
        out_shape=jax.ShapeDtypeStruct((B, S, H), jnp.bfloat16),
        grid=grid,
        in_specs=[q_spec, k_spec, v_spec, m_spec],
        out_specs=o_spec,
        scratch_shapes=[
            pltpu.VMEM((nH, tq, 1), jnp.float32),    # running max m
            pltpu.VMEM((nH, tq, 1), jnp.float32),    # running sum l
            pltpu.VMEM((nH, tq, Dh), jnp.float32),   # accumulator
        ],
        compiler_params=pltpu.CompilerParams(
            dimension_semantics=("parallel", "parallel", "arbitrary"),
            vmem_limit_bytes=VMEM_LIMIT_BYTES),
    )(qkv_heads, qkv_heads, qkv_heads, mask_bias)


def pallas_self_output(h_bf16, w_t, b_row, residual, gamma_row, beta_row, eps):
    """h_bf16: [N,H] bf16; w_t: [H,H] bf16; residual etc f32 -> [N,H] f32."""
    n, H = h_bf16.shape
    tm = _row_tile(n, _ROW_TILE_CAP)
    grid = (n // tm,)
    # TODO(synk): for very large H (>= ~2048) on v7x, K-tile the (H,H) weight
    # with a VMEM accumulator instead of keeping it fully resident.
    return pl.pallas_call(
        functools.partial(self_output_kernel, eps=eps),
        out_shape=jax.ShapeDtypeStruct((n, H), jnp.float32),
        grid=grid,
        in_specs=[
            pl.BlockSpec((tm, H), lambda i: (i, 0)),     # attention context
            pl.BlockSpec((H, H), lambda i: (0, 0)),      # weight, resident
            pl.BlockSpec((1, H), lambda i: (0, 0)),      # bias
            pl.BlockSpec((tm, H), lambda i: (i, 0)),     # residual
            pl.BlockSpec((1, H), lambda i: (0, 0)),      # LN gamma
            pl.BlockSpec((1, H), lambda i: (0, 0)),      # LN beta
        ],
        out_specs=pl.BlockSpec((tm, H), lambda i: (i, 0)),
        compiler_params=pltpu.CompilerParams(
            dimension_semantics=("parallel",),
            vmem_limit_bytes=VMEM_LIMIT_BYTES),
    )(h_bf16, w_t, b_row, residual, gamma_row, beta_row)


# ----------------------------------------------------------------------------
# BertAttention forward (return_att=False path, eval mode)
# ----------------------------------------------------------------------------
def bert_attention_forward(hidden_states, attention_mask, params, query_states=None):
    B, S, H = hidden_states.shape
    nH = params["num_heads"]

    x = hidden_states.astype(jnp.float32)

    # DisentangledSelfAttention in_proj (no bias) + q_bias / v_bias, fused QKV.
    # The 1/sqrt(Dh) attention scale is already folded into the Q columns.
    qkv_heads = pallas_qkv_projection(x, params["qkv_w"], params["qkv_b"], nH)

    # Additive key-mask bias: 0 for valid keys, -1e30 for masked keys.
    mask_bias = jnp.where(attention_mask.astype(jnp.float32) > 0,
                          jnp.float32(0.0), jnp.float32(-1e30)).reshape(B, 1, S)

    ctx = pallas_flash_attention(qkv_heads, mask_bias)   # [B, S, H] bf16
    ctx2 = ctx.reshape(B * S, H)                         # contiguous -> free

    # BertSelfOutput: dense -> +residual -> LayerNorm.
    if query_states is None:
        query_states = hidden_states
    residual = query_states.reshape(B * S, H).astype(jnp.float32)

    out = pallas_self_output(ctx2, params["out_w_t"], params["out_b_row"],
                             residual, params["ln_gamma_row"],
                             params["ln_beta_row"], params["ln_eps"])
    return out.reshape(B, S, H)


def init_params(key, hidden_size, num_heads, ln_eps=1e-7):
    k1, k2, k3, k4, k5 = jax.random.split(key, 5)
    std = 0.02
    H, nH = hidden_size, num_heads
    Dh = H // nH
    scale = 1.0 / math.sqrt(Dh)

    in_proj_w = jax.random.normal(k1, (3 * H, H), jnp.float32) * std   # torch [out=3H, in=H]
    q_bias = jax.random.normal(k2, (H,), jnp.float32) * std
    v_bias = jax.random.normal(k3, (H,), jnp.float32) * std
    out_w = jax.random.normal(k4, (H, H), jnp.float32) * std           # torch [out, in]
    out_b = jax.random.normal(k5, (H,), jnp.float32) * std

    # [out=3H, in=H] -> [in=H, out=3H]; out column order is (proj, head, dim).
    qkv_w = in_proj_w.T
    qkv_b = jnp.concatenate([q_bias, jnp.zeros((H,), jnp.float32), v_bias])
    # Fold the 1/sqrt(Dh) attention scale into the Q projection (weight + bias).
    col_scale = jnp.concatenate([jnp.full((H,), scale, jnp.float32),
                                 jnp.ones((2 * H,), jnp.float32)])
    qkv_w = qkv_w * col_scale[None, :]
    qkv_b = qkv_b * col_scale

    return {
        "num_heads": nH,
        "qkv_w": qkv_w.astype(jnp.bfloat16),        # [H, 3H], Q-scaled
        "qkv_b": qkv_b.reshape(1, 3 * H),           # [1, 3H] f32, Q-scaled
        "out_w_t": out_w.T.astype(jnp.bfloat16),    # [H, H] (in, out)
        "out_b_row": out_b.reshape(1, H),
        "ln_gamma_row": jnp.ones((1, H), jnp.float32),
        "ln_beta_row": jnp.zeros((1, H), jnp.float32),
        "ln_eps": ln_eps,
    }


# ----------------------------------------------------------------------------
# Pure-JAX reference (eval-mode BertAttention), for a correctness check.
# Consumes the same prepared params (attention scale already folded into Q).
# ----------------------------------------------------------------------------
def reference_forward(hidden_states, attention_mask, params, query_states=None):
    B, S, H = hidden_states.shape
    nH = params["num_heads"]
    Dh = H // nH
    w = params["qkv_w"].astype(jnp.float32)                    # [H, 3H] (Q pre-scaled)
    b = params["qkv_b"]                                        # [1, 3H]
    qkv = hidden_states.reshape(B * S, H) @ w + b              # [B*S, 3H]
    qkv = qkv.reshape(B, S, 3, nH, Dh).transpose(2, 0, 3, 1, 4)  # [3, B, nH, S, Dh]
    q, k, v = qkv[0], qkv[1], qkv[2]
    s = jnp.einsum("bnqd,bnkd->bnqk", q, k)                    # scale already folded
    mask = attention_mask.reshape(B, 1, 1, S)
    s = jnp.where(mask > 0, s, jnp.float32(-1e30))
    p = jax.nn.softmax(s, axis=-1)
    ctx = jnp.einsum("bnqk,bnkd->bnqd", p, v)
    ctx = ctx.transpose(0, 2, 1, 3).reshape(B * S, H)
    y = ctx @ params["out_w_t"].astype(jnp.float32) + params["out_b_row"]
    res = (query_states if query_states is not None else hidden_states).reshape(B * S, H)
    y = y + res
    mean = y.mean(-1, keepdims=True)
    c = y - mean
    var = (c * c).mean(-1, keepdims=True)
    y = c * lax.rsqrt(var + params["ln_eps"])
    y = y * params["ln_gamma_row"] + params["ln_beta_row"]
    return y.reshape(B, S, H)


if __name__ == "__main__":
    B, S, H, nH = 2, 8, 32, 4

    key = jax.random.PRNGKey(0)
    k_x, k_p = jax.random.split(key)
    hidden_states = jax.random.normal(k_x, (B, S, H), jnp.float32)
    attention_mask = jnp.ones((B, S), jnp.float32)
    attention_mask = attention_mask.at[1, -2:].set(0.0)   # mask last 2 keys of batch 1

    params = init_params(k_p, H, nH)

    fwd = jax.jit(lambda x, m: bert_attention_forward(x, m, params))
    out = jax.block_until_ready(fwd(hidden_states, attention_mask))

    assert out.shape == (B, S, H)
    assert bool(jnp.all(jnp.isfinite(out)))

    ref = reference_forward(hidden_states, attention_mask, params)
    max_err = float(jnp.max(jnp.abs(out - ref)))
    assert max_err < 5e-2, f"max abs err vs reference: {max_err}"

    print("KERNEL_OK")
</pallas_src>

<mosaic_0001>
module attributes {stable_mosaic.version = 11 : i64} {
  func.func @flash_attention_kernel(%arg0: i32, %arg1: i32, %arg2: i32, %arg3: memref<1x1x4x8x8xbf16, #tpu.memory_space<vmem>>, %arg4: memref<1x1x4x8x8xbf16, #tpu.memory_space<vmem>>, %arg5: memref<1x1x4x8x8xbf16, #tpu.memory_space<vmem>>, %arg6: memref<1x1x8xf32, #tpu.memory_space<vmem>>, %arg7: memref<1x8x32xbf16, #tpu.memory_space<vmem>>, %arg8: memref<4x8x1xf32, #tpu.memory_space<vmem>>, %arg9: memref<4x8x1xf32, #tpu.memory_space<vmem>>, %arg10: memref<4x8x8xf32, #tpu.memory_space<vmem>>) attributes {dimension_semantics = [#tpu.dimension_semantics<parallel>, #tpu.dimension_semantics<parallel>, #tpu.dimension_semantics<arbitrary>], iteration_bounds = array<i64: 2, 1, 1>, scalar_prefetch = 0 : i64, scratch_operands = 3 : i64, tpu.core_type = #tpu.core_type<tc>, window_params = [{transform_indices = @transform_0, window_bounds = array<i64: 1, 1, 4, 8, 8>}, {transform_indices = @transform_1, window_bounds = array<i64: 1, 1, 4, 8, 8>}, {transform_indices = @transform_2, window_bounds = array<i64: 1, 1, 4, 8, 8>}, {transform_indices = @transform_3, window_bounds = array<i64: 1, 1, 8>}, {transform_indices = @transform_4, window_bounds = array<i64: 1, 8, 32>}]} {
    %c0_i32 = arith.constant 0 : i32
    %0 = arith.cmpi eq, %arg2, %c0_i32 : i32
    %1 = arith.extui %0 : i1 to i32
    %c0_i32_0 = arith.constant 0 : i32
    %2 = arith.cmpi ne, %1, %c0_i32_0 : i32
    scf.if %2 {
      %cst_41 = arith.constant 0xFF800000 : f32
      %41 = vector.broadcast %cst_41 : f32 to vector<4x8x1xf32>
      %c0_42 = arith.constant 0 : index
      %c0_43 = arith.constant 0 : index
      %c0_44 = arith.constant 0 : index
      %42 = vector.load %arg8[%c0_42, %c0_43, %c0_44] : memref<4x8x1xf32, #tpu.memory_space<vmem>>, vector<4x8x1xf32>
      tpu.vector_store %arg8[%c0_42, %c0_43, %c0_44], %41 {strides = array<i32>} : memref<4x8x1xf32, #tpu.memory_space<vmem>>, vector<4x8x1xf32>,
      %cst_45 = arith.constant 0.000000e+00 : f32
      %43 = vector.broadcast %cst_45 : f32 to vector<4x8x1xf32>
      %c0_46 = arith.constant 0 : index
      %c0_47 = arith.constant 0 : index
      %c0_48 = arith.constant 0 : index
      %44 = vector.load %arg9[%c0_46, %c0_47, %c0_48] : memref<4x8x1xf32, #tpu.memory_space<vmem>>, vector<4x8x1xf32>
      tpu.vector_store %arg9[%c0_46, %c0_47, %c0_48], %43 {strides = array<i32>} : memref<4x8x1xf32, #tpu.memory_space<vmem>>, vector<4x8x1xf32>,
      %cst_49 = arith.constant 0.000000e+00 : f32
      %45 = vector.broadcast %cst_49 : f32 to vector<4x8x8xf32>
      %c0_50 = arith.constant 0 : index
      %c0_51 = arith.constant 0 : index
      %c0_52 = arith.constant 0 : index
      %46 = vector.load %arg10[%c0_50, %c0_51, %c0_52] : memref<4x8x8xf32, #tpu.memory_space<vmem>>, vector<4x8x8xf32>
      tpu.vector_store %arg10[%c0_50, %c0_51, %c0_52], %45 {strides = array<i32>} : memref<4x8x8xf32, #tpu.memory_space<vmem>>, vector<4x8x8xf32>,
    } else {
    }
    %c0 = arith.constant 0 : index
    %c0_1 = arith.constant 0 : index
    %c0_2 = arith.constant 0 : index
    %c0_3 = arith.constant 0 : index
    %c0_4 = arith.constant 0 : index
    %3 = vector.load %arg3[%c0, %c0_1, %c0_2, %c0_3, %c0_4] : memref<1x1x4x8x8xbf16, #tpu.memory_space<vmem>>, vector<1x1x4x8x8xbf16>
    %4 = vector.shape_cast %3 : vector<1x1x4x8x8xbf16> to vector<4x8x8xbf16>
    %c0_5 = arith.constant 0 : index
    %c0_6 = arith.constant 0 : index
    %c0_7 = arith.constant 0 : index
    %c0_8 = arith.constant 0 : index
    %c0_9 = arith.constant 0 : index
    %5 = vector.load %arg4[%c0_5, %c0_6, %c0_7, %c0_8, %c0_9] : memref<1x1x4x8x8xbf16, #tpu.memory_space<vmem>>, vector<1x1x4x8x8xbf16>
    %6 = vector.shape_cast %5 : vector<1x1x4x8x8xbf16> to vector<4x8x8xbf16>
    %c0_10 = arith.constant 0 : index
    %c0_11 = arith.constant 0 : index
    %c0_12 = arith.constant 0 : index
    %c0_13 = arith.constant 0 : index
    %c0_14 = arith.constant 0 : index
    %7 = vector.load %arg5[%c0_10, %c0_11, %c0_12, %c0_13, %c0_14] : memref<1x1x4x8x8xbf16, #tpu.memory_space<vmem>>, vector<1x1x4x8x8xbf16>
    %8 = vector.shape_cast %7 : vector<1x1x4x8x8xbf16> to vector<4x8x8xbf16>
    %c0_15 = arith.constant 0 : index
    %c0_16 = arith.constant 0 : index
    %c0_17 = arith.constant 0 : index
    %9 = vector.load %arg6[%c0_15, %c0_16, %c0_17] : memref<1x1x8xf32, #tpu.memory_space<vmem>>, vector<1x1x8xf32>
    %10 = vector.shape_cast %9 : vector<1x1x8xf32> to vector<1x8xf32>
    "tpu.trace_start"() <{level = 10 : i32, message = "hqd,hkd->hqk"}> : () -> ()
    %cst = arith.constant dense<0.000000e+00> : vector<4x8x8xf32>
    %11 = tpu.matmul %4, %6, %cst {dimension_numbers = #tpu.dot_dimension_numbers<[2], [2], [1], [1], [0, 0, 0, 1, 1, 1], [0], [0]>} : vector<4x8x8xbf16>, vector<4x8x8xbf16>, vector<4x8x8xf32> -> vector<4x8x8xf32>
    "tpu.trace_stop"() : () -> ()
    %12 = vector.shape_cast %10 : vector<1x8xf32> to vector<1x1x8xf32>
    %13 = vector.broadcast %12 : vector<1x1x8xf32> to vector<4x8x8xf32>
    %14 = arith.addf %11, %13 : vector<4x8x8xf32>
    %c0_18 = arith.constant 0 : index
    %c0_19 = arith.constant 0 : index
    %c0_20 = arith.constant 0 : index
    %15 = vector.load %arg8[%c0_18, %c0_19, %c0_20] : memref<4x8x1xf32, #tpu.memory_space<vmem>>, vector<4x8x1xf32>
    %cst_21 = arith.constant dense<0xFF800000> : vector<4x8xf32>
    %16 = vector.multi_reduction <maximumf>, %14, %cst_21 [2] : vector<4x8x8xf32> to vector<4x8xf32>
    %17 = vector.shape_cast %16 : vector<4x8xf32> to vector<4x8x1xf32>
    %18 = arith.maximumf %15, %17 : vector<4x8x1xf32>
    %19 = arith.subf %15, %18 : vector<4x8x1xf32>
    %20 = math.exp %19 : vector<4x8x1xf32>
    %21 = vector.broadcast %18 : vector<4x8x1xf32> to vector<4x8x8xf32>
    %22 = arith.subf %14, %21 : vector<4x8x8xf32>
    %23 = math.exp %22 : vector<4x8x8xf32>
    %c0_22 = arith.constant 0 : index
    %c0_23 = arith.constant 0 : index
    %c0_24 = arith.constant 0 : index
    %24 = vector.load %arg9[%c0_22, %c0_23, %c0_24] : memref<4x8x1xf32, #tpu.memory_space<vmem>>, vector<4x8x1xf32>
    %25 = arith.mulf %20, %24 : vector<4x8x1xf32>
    %cst_25 = arith.constant dense<0.000000e+00> : vector<4x8xf32>
    %26 = vector.multi_reduction <add>, %23, %cst_25 [2] : vector<4x8x8xf32> to vector<4x8xf32>
    %27 = vector.shape_cast %26 : vector<4x8xf32> to vector<4x8x1xf32>
    %28 = arith.addf %25, %27 : vector<4x8x1xf32>
    %c0_26 = arith.constant 0 : index
    %c0_27 = arith.constant 0 : index
    %c0_28 = arith.constant 0 : index
    %29 = vector.load %arg9[%c0_26, %c0_27, %c0_28] : memref<4x8x1xf32, #tpu.memory_space<vmem>>, vector<4x8x1xf32>
    tpu.vector_store %arg9[%c0_26, %c0_27, %c0_28], %28 {strides = array<i32>} : memref<4x8x1xf32, #tpu.memory_space<vmem>>, vector<4x8x1xf32>,
    %30 = arith.truncf %23 : vector<4x8x8xf32> to vector<4x8x8xbf16>
    "tpu.trace_start"() <{level = 10 : i32, message = "hqk,hkd->hqd"}> : () -> ()
    %cst_29 = arith.constant dense<0.000000e+00> : vector<4x8x8xf32>
    %31 = tpu.matmul %30, %8, %cst_29 {dimension_numbers = #tpu.dot_dimension_numbers<[2], [1], [1], [2], [0, 0, 0, 1, 1, 2], [0], [0]>} : vector<4x8x8xbf16>, vector<4x8x8xbf16>, vector<4x8x8xf32> -> vector<4x8x8xf32>
    "tpu.trace_stop"() : () -> ()
    %c0_30 = arith.constant 0 : index
    %c0_31 = arith.constant 0 : index
    %c0_32 = arith.constant 0 : index
    %32 = vector.load %arg10[%c0_30, %c0_31, %c0_32] : memref<4x8x8xf32, #tpu.memory_space<vmem>>, vector<4x8x8xf32>
    %33 = vector.broadcast %20 : vector<4x8x1xf32> to vector<4x8x8xf32>
    %34 = arith.mulf %33, %32 : vector<4x8x8xf32>
    %35 = arith.addf %34, %31 : vector<4x8x8xf32>
    %c0_33 = arith.constant 0 : index
    %c0_34 = arith.constant 0 : index
    %c0_35 = arith.constant 0 : index
    %36 = vector.load %arg10[%c0_33, %c0_34, %c0_35] : memref<4x8x8xf32, #tpu.memory_space<vmem>>, vector<4x8x8xf32>
    tpu.vector_store %arg10[%c0_33, %c0_34, %c0_35], %35 {strides = array<i32>} : memref<4x8x8xf32, #tpu.memory_space<vmem>>, vector<4x8x8xf32>,
    %c0_36 = arith.constant 0 : index
    %c0_37 = arith.constant 0 : index
    %c0_38 = arith.constant 0 : index
    %37 = vector.load %arg8[%c0_36, %c0_37, %c0_38] : memref<4x8x1xf32, #tpu.memory_space<vmem>>, vector<4x8x1xf32>
    tpu.vector_store %arg8[%c0_36, %c0_37, %c0_38], %18 {strides = array<i32>} : memref<4x8x1xf32, #tpu.memory_space<vmem>>, vector<4x8x1xf32>,
    %c0_i32_39 = arith.constant 0 : i32
    %38 = arith.cmpi eq, %arg2, %c0_i32_39 : i32
    %39 = arith.extui %38 : i1 to i32
    %c0_i32_40 = arith.constant 0 : i32
    %40 = arith.cmpi ne, %39, %c0_i32_40 : i32
    scf.if %40 {
      %c0_41 = arith.constant 0 : index
      %c0_42 = arith.constant 0 : index
      %c0_43 = arith.constant 0 : index
      %41 = vector.load %arg9[%c0_41, %c0_42, %c0_43] : memref<4x8x1xf32, #tpu.memory_space<vmem>>, vector<4x8x1xf32>
      %42 = tpu.reciprocal %41 {approx = true} : vector<4x8x1xf32> -> vector<4x8x1xf32>
      %c0_44 = arith.constant 0 : index
      %c0_45 = arith.constant 0 : index
      %c0_46 = arith.constant 0 : index
      %43 = vector.load %arg10[%c0_44, %c0_45, %c0_46] : memref<4x8x8xf32, #tpu.memory_space<vmem>>, vector<4x8x8xf32>
      %44 = vector.broadcast %42 : vector<4x8x1xf32> to vector<4x8x8xf32>
      %45 = arith.mulf %43, %44 : vector<4x8x8xf32>
      %46 = vector.extract_strided_slice %45 {offsets = [0, 0, 0], sizes = [1, 8, 8], strides = [1, 1, 1]} : vector<4x8x8xf32> to vector<1x8x8xf32>
      %47 = vector.shape_cast %46 : vector<1x8x8xf32> to vector<8x8xf32>
      %48 = arith.truncf %47 : vector<8x8xf32> to vector<8x8xbf16>
      %c0_47 = arith.constant 0 : index
      %c0_48 = arith.constant 0 : index
      %c0_49 = arith.constant 0 : index
      %49 = vector.load %arg7[%c0_47, %c0_48, %c0_49] : memref<1x8x32xbf16, #tpu.memory_space<vmem>>, vector<1x8x8xbf16>
      %50 = vector.shape_cast %49 : vector<1x8x8xbf16> to vector<8x8xbf16>
      %51 = vector.shape_cast %48 : vector<8x8xbf16> to vector<1x8x8xbf16>
      tpu.vector_store %arg7[%c0_47, %c0_48, %c0_49], %51 {strides = array<i32>} : memref<1x8x32xbf16, #tpu.memory_space<vmem>>, vector<1x8x8xbf16>,
      %52 = vector.extract_strided_slice %45 {offsets = [1, 0, 0], sizes = [1, 8, 8], strides = [1, 1, 1]} : vector<4x8x8xf32> to vector<1x8x8xf32>
      %53 = vector.shape_cast %52 : vector<1x8x8xf32> to vector<8x8xf32>
      %54 = arith.truncf %53 : vector<8x8xf32> to vector<8x8xbf16>
      %c0_50 = arith.constant 0 : index
      %c0_51 = arith.constant 0 : index
      %c8 = arith.constant 8 : index
      %55 = vector.load %arg7[%c0_50, %c0_51, %c8] : memref<1x8x32xbf16, #tpu.memory_space<vmem>>, vector<1x8x8xbf16>
      %56 = vector.shape_cast %55 : vector<1x8x8xbf16> to vector<8x8xbf16>
      %57 = vector.shape_cast %54 : vector<8x8xbf16> to vector<1x8x8xbf16>
      tpu.vector_store %arg7[%c0_50, %c0_51, %c8], %57 {strides = array<i32>} : memref<1x8x32xbf16, #tpu.memory_space<vmem>>, vector<1x8x8xbf16>,
      %58 = vector.extract_strided_slice %45 {offsets = [2, 0, 0], sizes = [1, 8, 8], strides = [1, 1, 1]} : vector<4x8x8xf32> to vector<1x8x8xf32>
      %59 = vector.shape_cast %58 : vector<1x8x8xf32> to vector<8x8xf32>
      %60 = arith.truncf %59 : vector<8x8xf32> to vector<8x8xbf16>
      %c0_52 = arith.constant 0 : index
      %c0_53 = arith.constant 0 : index
      %c16 = arith.constant 16 : index
      %61 = vector.load %arg7[%c0_52, %c0_53, %c16] : memref<1x8x32xbf16, #tpu.memory_space<vmem>>, vector<1x8x8xbf16>
      %62 = vector.shape_cast %61 : vector<1x8x8xbf16> to vector<8x8xbf16>
      %63 = vector.shape_cast %60 : vector<8x8xbf16> to vector<1x8x8xbf16>
      tpu.vector_store %arg7[%c0_52, %c0_53, %c16], %63 {strides = array<i32>} : memref<1x8x32xbf16, #tpu.memory_space<vmem>>, vector<1x8x8xbf16>,
      %64 = vector.extract_strided_slice %45 {offsets = [3, 0, 0], sizes = [1, 8, 8], strides = [1, 1, 1]} : vector<4x8x8xf32> to vector<1x8x8xf32>
      %65 = vector.shape_cast %64 : vector<1x8x8xf32> to vector<8x8xf32>
      %66 = arith.truncf %65 : vector<8x8xf32> to vector<8x8xbf16>
      %c0_54 = arith.constant 0 : index
      %c0_55 = arith.constant 0 : index
      %c24 = arith.constant 24 : index
      %67 = vector.load %arg7[%c0_54, %c0_55, %c24] : memref<1x8x32xbf16, #tpu.memory_space<vmem>>, vector<1x8x8xbf16>
      %68 = vector.shape_cast %67 : vector<1x8x8xbf16> to vector<8x8xbf16>
      %69 = vector.shape_cast %66 : vector<8x8xbf16> to vector<1x8x8xbf16>
      tpu.vector_store %arg7[%c0_54, %c0_55, %c24], %69 {strides = array<i32>} : memref<1x8x32xbf16, #tpu.memory_space<vmem>>, vector<1x8x8xbf16>,
    } else {
    }
    return
  }
  func.func @transform_0(%arg0: i32, %arg1: i32, %arg2: i32) -> (i32, i32, i32, i32, i32) {
    %c0_i32 = arith.constant 0 : i32
    %c0_i32_0 = arith.constant 0 : i32
    %c0_i32_1 = arith.constant 0 : i32
    %c0_i32_2 = arith.constant 0 : i32
    return %c0_i32, %arg0, %c0_i32_0, %arg1, %c0_i32_1 : i32, i32, i32, i32, i32
  }
  func.func @transform_1(%arg0: i32, %arg1: i32, %arg2: i32) -> (i32, i32, i32, i32, i32) {
    %c1_i32 = arith.constant 1 : i32
    %c0_i32 = arith.constant 0 : i32
    %c0_i32_0 = arith.constant 0 : i32
    %c0_i32_1 = arith.constant 0 : i32
    return %c1_i32, %arg0, %c0_i32, %arg2, %c0_i32_0 : i32, i32, i32, i32, i32
  }
  func.func @transform_2(%arg0: i32, %arg1: i32, %arg2: i32) -> (i32, i32, i32, i32, i32) {
    %c2_i32 = arith.constant 2 : i32
    %c0_i32 = arith.constant 0 : i32
    %c0_i32_0 = arith.constant 0 : i32
    %c0_i32_1 = arith.constant 0 : i32
    return %c2_i32, %arg0, %c0_i32, %arg2, %c0_i32_0 : i32, i32, i32, i32, i32
  }
  func.func @transform_3(%arg0: i32, %arg1: i32, %arg2: i32) -> (i32, i32, i32) {
    %c0_i32 = arith.constant 0 : i32
    %c0_i32_0 = arith.constant 0 : i32
    return %arg0, %c0_i32, %arg2 : i32, i32, i32
  }
  func.func @transform_4(%arg0: i32, %arg1: i32, %arg2: i32) -> (i32, i32, i32) {
    %c0_i32 = arith.constant 0 : i32
    %c0_i32_0 = arith.constant 0 : i32
    return %arg0, %arg1, %c0_i32 : i32, i32, i32
  }
}

module attributes {stable_mosaic.version = 11 : i64} {
  func.func @qkv_proj_kernel(%arg0: i32, %arg1: i32, %arg2: memref<1x8x32xf32, #tpu.memory_space<vmem>>, %arg3: memref<32x96xbf16, #tpu.memory_space<vmem>>, %arg4: memref<1x96xf32, #tpu.memory_space<vmem>>, %arg5: memref<3x1x4x8x8xbf16, #tpu.memory_space<vmem>>) attributes {dimension_semantics = [#tpu.dimension_semantics<parallel>, #tpu.dimension_semantics<parallel>], iteration_bounds = array<i64: 2, 1>, scalar_prefetch = 0 : i64, scratch_operands = 0 : i64, tpu.core_type = #tpu.core_type<tc>, window_params = [{transform_indices = @transform_0, window_bounds = array<i64: 1, 8, 32>}, {pipeline_mode = #tpu.pipeline_mode<synchronous>, transform_indices = @transform_1, window_bounds = array<i64: 32, 96>}, {pipeline_mode = #tpu.pipeline_mode<synchronous>, transform_indices = @transform_2, window_bounds = array<i64: 1, 96>}, {transform_indices = @transform_3, window_bounds = array<i64: 3, 1, 4, 8, 8>}]} {
    %c0 = arith.constant 0 : index
    %c0_0 = arith.constant 0 : index
    %c0_1 = arith.constant 0 : index
    %0 = vector.load %arg2[%c0, %c0_0, %c0_1] : memref<1x8x32xf32, #tpu.memory_space<vmem>>, vector<1x8x32xf32>
    %1 = vector.shape_cast %0 : vector<1x8x32xf32> to vector<8x32xf32>
    %2 = arith.truncf %1 : vector<8x32xf32> to vector<8x32xbf16>
    %c0_2 = arith.constant 0 : index
    %c0_3 = arith.constant 0 : index
    %3 = vector.load %arg3[%c0_2, %c0_3] : memref<32x96xbf16, #tpu.memory_space<vmem>>, vector<32x96xbf16>
    %cst = arith.constant dense<0.000000e+00> : vector<8x96xf32>
    %4 = tpu.matmul %2, %3, %cst {dimension_numbers = #tpu.dot_dimension_numbers<[1], [0], [0], [1], [0, 0, 1, 1], [], []>} : vector<8x32xbf16>, vector<32x96xbf16>, vector<8x96xf32> -> vector<8x96xf32>
    %c0_4 = arith.constant 0 : index
    %c0_5 = arith.constant 0 : index
    %5 = vector.load %arg4[%c0_4, %c0_5] : memref<1x96xf32, #tpu.memory_space<vmem>>, vector<1x96xf32>
    %6 = vector.broadcast %5 : vector<1x96xf32> to vector<8x96xf32>
    %7 = arith.addf %4, %6 : vector<8x96xf32>
    %8 = arith.truncf %7 : vector<8x96xf32> to vector<8x96xbf16>
    %9 = vector.extract_strided_slice %8 {offsets = [0, 0], sizes = [8, 8], strides = [1, 1]} : vector<8x96xbf16> to vector<8x8xbf16>
    %c0_6 = arith.constant 0 : index
    %c0_7 = arith.constant 0 : index
    %c0_8 = arith.constant 0 : index
    %c0_9 = arith.constant 0 : index
    %c0_10 = arith.constant 0 : index
    %10 = vector.load %arg5[%c0_6, %c0_7, %c0_8, %c0_9, %c0_10] : memref<3x1x4x8x8xbf16, #tpu.memory_space<vmem>>, vector<1x1x1x8x8xbf16>
    %11 = vector.shape_cast %10 : vector<1x1x1x8x8xbf16> to vector<8x8xbf16>
    %12 = vector.shape_cast %9 : vector<8x8xbf16> to vector<1x1x1x8x8xbf16>
    tpu.vector_store %arg5[%c0_6, %c0_7, %c0_8, %c0_9, %c0_10], %12 {strides = array<i32>} : memref<3x1x4x8x8xbf16, #tpu.memory_space<vmem>>, vector<1x1x1x8x8xbf16>,
    %13 = vector.extract_strided_slice %8 {offsets = [0, 8], sizes = [8, 8], strides = [1, 1]} : vector<8x96xbf16> to vector<8x8xbf16>
    %c0_11 = arith.constant 0 : index
    %c0_12 = arith.constant 0 : index
    %c1 = arith.constant 1 : index
    %c0_13 = arith.constant 0 : index
    %c0_14 = arith.constant 0 : index
    %14 = vector.load %arg5[%c0_11, %c0_12, %c1, %c0_13, %c0_14] : memref<3x1x4x8x8xbf16, #tpu.memory_space<vmem>>, vector<1x1x1x8x8xbf16>
    %15 = vector.shape_cast %14 : vector<1x1x1x8x8xbf16> to vector<8x8xbf16>
    %16 = vector.shape_cast %13 : vector<8x8xbf16> to vector<1x1x1x8x8xbf16>
    tpu.vector_store %arg5[%c0_11, %c0_12, %c1, %c0_13, %c0_14], %16 {strides = array<i32>} : memref<3x1x4x8x8xbf16, #tpu.memory_space<vmem>>, vector<1x1x1x8x8xbf16>,
    %17 = vector.extract_strided_slice %8 {offsets = [0, 16], sizes = [8, 8], strides = [1, 1]} : vector<8x96xbf16> to vector<8x8xbf16>
    %c0_15 = arith.constant 0 : index
    %c0_16 = arith.constant 0 : index
    %c2 = arith.constant 2 : index
    %c0_17 = arith.constant 0 : index
    %c0_18 = arith.constant 0 : index
    %18 = vector.load %arg5[%c0_15, %c0_16, %c2, %c0_17, %c0_18] : memref<3x1x4x8x8xbf16, #tpu.memory_space<vmem>>, vector<1x1x1x8x8xbf16>
    %19 = vector.shape_cast %18 : vector<1x1x1x8x8xbf16> to vector<8x8xbf16>
    %20 = vector.shape_cast %17 : vector<8x8xbf16> to vector<1x1x1x8x8xbf16>
    tpu.vector_store %arg5[%c0_15, %c0_16, %c2, %c0_17, %c0_18], %20 {strides = array<i32>} : memref<3x1x4x8x8xbf16, #tpu.memory_space<vmem>>, vector<1x1x1x8x8xbf16>,
    %21 = vector.extract_strided_slice %8 {offsets = [0, 24], sizes = [8, 8], strides = [1, 1]} : vector<8x96xbf16> to vector<8x8xbf16>
    %c0_19 = arith.constant 0 : index
    %c0_20 = arith.constant 0 : index
    %c3 = arith.constant 3 : index
    %c0_21 = arith.constant 0 : index
    %c0_22 = arith.constant 0 : index
    %22 = vector.load %arg5[%c0_19, %c0_20, %c3, %c0_21, %c0_22] : memref<3x1x4x8x8xbf16, #tpu.memory_space<vmem>>, vector<1x1x1x8x8xbf16>
    %23 = vector.shape_cast %22 : vector<1x1x1x8x8xbf16> to vector<8x8xbf16>
    %24 = vector.shape_cast %21 : vector<8x8xbf16> to vector<1x1x1x8x8xbf16>
    tpu.vector_store %arg5[%c0_19, %c0_20, %c3, %c0_21, %c0_22], %24 {strides = array<i32>} : memref<3x1x4x8x8xbf16, #tpu.memory_space<vmem>>, vector<1x1x1x8x8xbf16>,
    %25 = vector.extract_strided_slice %8 {offsets = [0, 32], sizes = [8, 8], strides = [1, 1]} : vector<8x96xbf16> to vector<8x8xbf16>
    %c1_23 = arith.constant 1 : index
    %c0_24 = arith.constant 0 : index
    %c0_25 = arith.constant 0 : index
    %c0_26 = arith.constant 0 : index
    %c0_27 = arith.constant 0 : index
    %26 = vector.load %arg5[%c1_23, %c0_24, %c0_25, %c0_26, %c0_27] : memref<3x1x4x8x8xbf16, #tpu.memory_space<vmem>>, vector<1x1x1x8x8xbf16>
    %27 = vector.shape_cast %26 : vector<1x1x1x8x8xbf16> to vector<8x8xbf16>
    %28 = vector.shape_cast %25 : vector<8x8xbf16> to vector<1x1x1x8x8xbf16>
    tpu.vector_store %arg5[%c1_23, %c0_24, %c0_25, %c0_26, %c0_27], %28 {strides = array<i32>} : memref<3x1x4x8x8xbf16, #tpu.memory_space<vmem>>, vector<1x1x1x8x8xbf16>,
    %29 = vector.extract_strided_slice %8 {offsets = [0, 40], sizes = [8, 8], strides = [1, 1]} : vector<8x96xbf16> to vector<8x8xbf16>
    %c1_28 = arith.constant 1 : index
    %c0_29 = arith.constant 0 : index
    %c1_30 = arith.constant 1 : index
    %c0_31 = arith.constant 0 : index
    %c0_32 = arith.constant 0 : index
    %30 = vector.load %arg5[%c1_28, %c0_29, %c1_30, %c0_31, %c0_32] : memref<3x1x4x8x8xbf16, #tpu.memory_space<vmem>>, vector<1x1x1x8x8xbf16>
    %31 = vector.shape_cast %30 : vector<1x1x1x8x8xbf16> to vector<8x8xbf16>
    %32 = vector.shape_cast %29 : vector<8x8xbf16> to vector<1x1x1x8x8xbf16>
    tpu.vector_store %arg5[%c1_28, %c0_29, %c1_30, %c0_31, %c0_32], %32 {strides = array<i32>} : memref<3x1x4x8x8xbf16, #tpu.memory_space<vmem>>, vector<1x1x1x8x8xbf16>,
    %33 = vector.extract_strided_slice %8 {offsets = [0, 48], sizes = [8, 8], strides = [1, 1]} : vector<8x96xbf16> to vector<8x8xbf16>
    %c1_33 = arith.constant 1 : index
    %c0_34 = arith.constant 0 : index
    %c2_35 = arith.constant 2 : index
    %c0_36 = arith.constant 0 : index
    %c0_37 = arith.constant 0 : index
    %34 = vector.load %arg5[%c1_33, %c0_34, %c2_35, %c0_36, %c0_37] : memref<3x1x4x8x8xbf16, #tpu.memory_space<vmem>>, vector<1x1x1x8x8xbf16>
    %35 = vector.shape_cast %34 : vector<1x1x1x8x8xbf16> to vector<8x8xbf16>
    %36 = vector.shape_cast %33 : vector<8x8xbf16> to vector<1x1x1x8x8xbf16>
    tpu.vector_store %arg5[%c1_33, %c0_34, %c2_35, %c0_36, %c0_37], %36 {strides = array<i32>} : memref<3x1x4x8x8xbf16, #tpu.memory_space<vmem>>, vector<1x1x1x8x8xbf16>,
    %37 = vector.extract_strided_slice %8 {offsets = [0, 56], sizes = [8, 8], strides = [1, 1]} : vector<8x96xbf16> to vector<8x8xbf16>
    %c1_38 = arith.constant 1 : index
    %c0_39 = arith.constant 0 : index
    %c3_40 = arith.constant 3 : index
    %c0_41 = arith.constant 0 : index
    %c0_42 = arith.constant 0 : index
    %38 = vector.load %arg5[%c1_38, %c0_39, %c3_40, %c0_41, %c0_42] : memref<3x1x4x8x8xbf16, #tpu.memory_space<vmem>>, vector<1x1x1x8x8xbf16>
    %39 = vector.shape_cast %38 : vector<1x1x1x8x8xbf16> to vector<8x8xbf16>
    %40 = vector.shape_cast %37 : vector<8x8xbf16> to vector<1x1x1x8x8xbf16>
    tpu.vector_store %arg5[%c1_38, %c0_39, %c3_40, %c0_41, %c0_42], %40 {strides = array<i32>} : memref<3x1x4x8x8xbf16, #tpu.memory_space<vmem>>, vector<1x1x1x8x8xbf16>,
    %41 = vector.extract_strided_slice %8 {offsets = [0, 64], sizes = [8, 8], strides = [1, 1]} : vector<8x96xbf16> to vector<8x8xbf16>
    %c2_43 = arith.constant 2 : index
    %c0_44 = arith.constant 0 : index
    %c0_45 = arith.constant 0 : index
    %c0_46 = arith.constant 0 : index
    %c0_47 = arith.constant 0 : index
    %42 = vector.load %arg5[%c2_43, %c0_44, %c0_45, %c0_46, %c0_47] : memref<3x1x4x8x8xbf16, #tpu.memory_space<vmem>>, vector<1x1x1x8x8xbf16>
    %43 = vector.shape_cast %42 : vector<1x1x1x8x8xbf16> to vector<8x8xbf16>
    %44 = vector.shape_cast %41 : vector<8x8xbf16> to vector<1x1x1x8x8xbf16>
    tpu.vector_store %arg5[%c2_43, %c0_44, %c0_45, %c0_46, %c0_47], %44 {strides = array<i32>} : memref<3x1x4x8x8xbf16, #tpu.memory_space<vmem>>, vector<1x1x1x8x8xbf16>,
    %45 = vector.extract_strided_slice %8 {offsets = [0, 72], sizes = [8, 8], strides = [1, 1]} : vector<8x96xbf16> to vector<8x8xbf16>
    %c2_48 = arith.constant 2 : index
    %c0_49 = arith.constant 0 : index
    %c1_50 = arith.constant 1 : index
    %c0_51 = arith.constant 0 : index
    %c0_52 = arith.constant 0 : index
    %46 = vector.load %arg5[%c2_48, %c0_49, %c1_50, %c0_51, %c0_52] : memref<3x1x4x8x8xbf16, #tpu.memory_space<vmem>>, vector<1x1x1x8x8xbf16>
    %47 = vector.shape_cast %46 : vector<1x1x1x8x8xbf16> to vector<8x8xbf16>
    %48 = vector.shape_cast %45 : vector<8x8xbf16> to vector<1x1x1x8x8xbf16>
    tpu.vector_store %arg5[%c2_48, %c0_49, %c1_50, %c0_51, %c0_52], %48 {strides = array<i32>} : memref<3x1x4x8x8xbf16, #tpu.memory_space<vmem>>, vector<1x1x1x8x8xbf16>,
    %49 = vector.extract_strided_slice %8 {offsets = [0, 80], sizes = [8, 8], strides = [1, 1]} : vector<8x96xbf16> to vector<8x8xbf16>
    %c2_53 = arith.constant 2 : index
    %c0_54 = arith.constant 0 : index
    %c2_55 = arith.constant 2 : index
    %c0_56 = arith.constant 0 : index
    %c0_57 = arith.constant 0 : index
    %50 = vector.load %arg5[%c2_53, %c0_54, %c2_55, %c0_56, %c0_57] : memref<3x1x4x8x8xbf16, #tpu.memory_space<vmem>>, vector<1x1x1x8x8xbf16>
    %51 = vector.shape_cast %50 : vector<1x1x1x8x8xbf16> to vector<8x8xbf16>
    %52 = vector.shape_cast %49 : vector<8x8xbf16> to vector<1x1x1x8x8xbf16>
    tpu.vector_store %arg5[%c2_53, %c0_54, %c2_55, %c0_56, %c0_57], %52 {strides = array<i32>} : memref<3x1x4x8x8xbf16, #tpu.memory_space<vmem>>, vector<1x1x1x8x8xbf16>,
    %53 = vector.extract_strided_slice %8 {offsets = [0, 88], sizes = [8, 8], strides = [1, 1]} : vector<8x96xbf16> to vector<8x8xbf16>
    %c2_58 = arith.constant 2 : index
    %c0_59 = arith.constant 0 : index
    %c3_60 = arith.constant 3 : index
    %c0_61 = arith.constant 0 : index
    %c0_62 = arith.constant 0 : index
    %54 = vector.load %arg5[%c2_58, %c0_59, %c3_60, %c0_61, %c0_62] : memref<3x1x4x8x8xbf16, #tpu.memory_space<vmem>>, vector<1x1x1x8x8xbf16>
    %55 = vector.shape_cast %54 : vector<1x1x1x8x8xbf16> to vector<8x8xbf16>
    %56 = vector.shape_cast %53 : vector<8x8xbf16> to vector<1x1x1x8x8xbf16>
    tpu.vector_store %arg5[%c2_58, %c0_59, %c3_60, %c0_61, %c0_62], %56 {strides = array<i32>} : memref<3x1x4x8x8xbf16, #tpu.memory_space<vmem>>, vector<1x1x1x8x8xbf16>,
    return
  }
  func.func @transform_0(%arg0: i32, %arg1: i32) -> (i32, i32, i32) {
    %c0_i32 = arith.constant 0 : i32
    %c0_i32_0 = arith.constant 0 : i32
    return %arg0, %arg1, %c0_i32 : i32, i32, i32
  }
  func.func @transform_1(%arg0: i32, %arg1: i32) -> (i32, i32) {
    %c0_i32 = arith.constant 0 : i32
    %c0_i32_0 = arith.constant 0 : i32
    %c0_i32_1 = arith.constant 0 : i32
    return %c0_i32, %c0_i32_0 : i32, i32
  }
  func.func @transform_2(%arg0: i32, %arg1: i32) -> (i32, i32) {
    %c0_i32 = arith.constant 0 : i32
    %c0_i32_0 = arith.constant 0 : i32
    %c0_i32_1 = arith.constant 0 : i32
    return %c0_i32, %c0_i32_0 : i32, i32
  }
  func.func @transform_3(%arg0: i32, %arg1: i32) -> (i32, i32, i32, i32, i32) {
    %c0_i32 = arith.constant 0 : i32
    %c0_i32_0 = arith.constant 0 : i32
    %c0_i32_1 = arith.constant 0 : i32
    %c0_i32_2 = arith.constant 0 : i32
    return %c0_i32, %arg0, %c0_i32_0, %arg1, %c0_i32_1 : i32, i32, i32, i32, i32
  }
}

module attributes {stable_mosaic.version = 11 : i64} {
  func.func @self_output_kernel(%arg0: i32, %arg1: memref<16x32xbf16, #tpu.memory_space<vmem>>, %arg2: memref<32x32xbf16, #tpu.memory_space<vmem>>, %arg3: memref<1x32xf32, #tpu.memory_space<vmem>>, %arg4: memref<16x32xf32, #tpu.memory_space<vmem>>, %arg5: memref<1x32xf32, #tpu.memory_space<vmem>>, %arg6: memref<1x32xf32, #tpu.memory_space<vmem>>, %arg7: memref<16x32xf32, #tpu.memory_space<vmem>>) attributes {dimension_semantics = [#tpu.dimension_semantics<parallel>], iteration_bounds = array<i64: 1>, scalar_prefetch = 0 : i64, scratch_operands = 0 : i64, tpu.core_type = #tpu.core_type<tc>, window_params = [{transform_indices = @transform_0, window_bounds = array<i64: 16, 32>}, {pipeline_mode = #tpu.pipeline_mode<synchronous>, transform_indices = @transform_1, window_bounds = array<i64: 32, 32>}, {pipeline_mode = #tpu.pipeline_mode<synchronous>, transform_indices = @transform_2, window_bounds = array<i64: 1, 32>}, {transform_indices = @transform_3, window_bounds = array<i64: 16, 32>}, {pipeline_mode = #tpu.pipeline_mode<synchronous>, transform_indices = @transform_4, window_bounds = array<i64: 1, 32>}, {pipeline_mode = #tpu.pipeline_mode<synchronous>, transform_indices = @transform_5, window_bounds = array<i64: 1, 32>}, {transform_indices = @transform_6, window_bounds = array<i64: 16, 32>}]} {
    %c0 = arith.constant 0 : index
    %c0_0 = arith.constant 0 : index
    %0 = vector.load %arg1[%c0, %c0_0] : memref<16x32xbf16, #tpu.memory_space<vmem>>, vector<16x32xbf16>
    %c0_1 = arith.constant 0 : index
    %c0_2 = arith.constant 0 : index
    %1 = vector.load %arg2[%c0_1, %c0_2] : memref<32x32xbf16, #tpu.memory_space<vmem>>, vector<32x32xbf16>
    %cst = arith.constant dense<0.000000e+00> : vector<16x32xf32>
    %2 = tpu.matmul %0, %1, %cst {dimension_numbers = #tpu.dot_dimension_numbers<[1], [0], [0], [1], [0, 0, 1, 1], [], []>} : vector<16x32xbf16>, vector<32x32xbf16>, vector<16x32xf32> -> vector<16x32xf32>
    %c0_3 = arith.constant 0 : index
    %c0_4 = arith.constant 0 : index
    %3 = vector.load %arg3[%c0_3, %c0_4] : memref<1x32xf32, #tpu.memory_space<vmem>>, vector<1x32xf32>
    %4 = vector.broadcast %3 : vector<1x32xf32> to vector<16x32xf32>
    %5 = arith.addf %2, %4 : vector<16x32xf32>
    %c0_5 = arith.constant 0 : index
    %c0_6 = arith.constant 0 : index
    %6 = vector.load %arg4[%c0_5, %c0_6] : memref<16x32xf32, #tpu.memory_space<vmem>>, vector<16x32xf32>
    %7 = arith.addf %5, %6 : vector<16x32xf32>
    %cst_7 = arith.constant dense<0.000000e+00> : vector<16xf32>
    %8 = vector.multi_reduction <add>, %7, %cst_7 [1] : vector<16x32xf32> to vector<16xf32>
    %9 = vector.shape_cast %8 : vector<16xf32> to vector<16x1xf32>
    %cst_8 = arith.constant 3.200000e+01 : f32
    %10 = vector.broadcast %cst_8 : f32 to vector<16x1xf32>
    %11 = arith.divf %9, %10 : vector<16x1xf32>
    %12 = vector.broadcast %11 : vector<16x1xf32> to vector<16x32xf32>
    %13 = arith.subf %7, %12 : vector<16x32xf32>
    %14 = arith.mulf %13, %13 : vector<16x32xf32>
    %cst_9 = arith.constant dense<0.000000e+00> : vector<16xf32>
    %15 = vector.multi_reduction <add>, %14, %cst_9 [1] : vector<16x32xf32> to vector<16xf32>
    %16 = vector.shape_cast %15 : vector<16xf32> to vector<16x1xf32>
    %cst_10 = arith.constant 3.200000e+01 : f32
    %17 = vector.broadcast %cst_10 : f32 to vector<16x1xf32>
    %18 = arith.divf %16, %17 : vector<16x1xf32>
    %cst_11 = arith.constant 1.000000e-07 : f32
    %19 = vector.broadcast %cst_11 : f32 to vector<16x1xf32>
    %20 = arith.addf %18, %19 : vector<16x1xf32>
    %21 = math.rsqrt %20 : vector<16x1xf32>
    %22 = vector.broadcast %21 : vector<16x1xf32> to vector<16x32xf32>
    %23 = arith.mulf %13, %22 : vector<16x32xf32>
    %c0_12 = arith.constant 0 : index
    %c0_13 = arith.constant 0 : index
    %24 = vector.load %arg5[%c0_12, %c0_13] : memref<1x32xf32, #tpu.memory_space<vmem>>, vector<1x32xf32>
    %25 = vector.broadcast %24 : vector<1x32xf32> to vector<16x32xf32>
    %26 = arith.mulf %23, %25 : vector<16x32xf32>
    %c0_14 = arith.constant 0 : index
    %c0_15 = arith.constant 0 : index
    %27 = vector.load %arg6[%c0_14, %c0_15] : memref<1x32xf32, #tpu.memory_space<vmem>>, vector<1x32xf32>
    %28 = vector.broadcast %27 : vector<1x32xf32> to vector<16x32xf32>
    %29 = arith.addf %26, %28 : vector<16x32xf32>
    %c0_16 = arith.constant 0 : index
    %c0_17 = arith.constant 0 : index
    %30 = vector.load %arg7[%c0_16, %c0_17] : memref<16x32xf32, #tpu.memory_space<vmem>>, vector<16x32xf32>
    tpu.vector_store %arg7[%c0_16, %c0_17], %29 {strides = array<i32>} : memref<16x32xf32, #tpu.memory_space<vmem>>, vector<16x32xf32>,
    return
  }
  func.func @transform_0(%arg0: i32) -> (i32, i32) {
    %c0_i32 = arith.constant 0 : i32
    %c0_i32_0 = arith.constant 0 : i32
    return %arg0, %c0_i32 : i32, i32
  }
  func.func @transform_1(%arg0: i32) -> (i32, i32) {
    %c0_i32 = arith.constant 0 : i32
    %c0_i32_0 = arith.constant 0 : i32
    %c0_i32_1 = arith.constant 0 : i32
    return %c0_i32, %c0_i32_0 : i32, i32
  }
  func.func @transform_2(%arg0: i32) -> (i32, i32) {
    %c0_i32 = arith.constant 0 : i32
    %c0_i32_0 = arith.constant 0 : i32
    %c0_i32_1 = arith.constant 0 : i32
    return %c0_i32, %c0_i32_0 : i32, i32
  }
  func.func @transform_3(%arg0: i32) -> (i32, i32) {
    %c0_i32 = arith.constant 0 : i32
    %c0_i32_0 = arith.constant 0 : i32
    return %arg0, %c0_i32 : i32, i32
  }
  func.func @transform_4(%arg0: i32) -> (i32, i32) {
    %c0_i32 = arith.constant 0 : i32
    %c0_i32_0 = arith.constant 0 : i32
    %c0_i32_1 = arith.constant 0 : i32
    return %c0_i32, %c0_i32_0 : i32, i32
  }
  func.func @transform_5(%arg0: i32) -> (i32, i32) {
    %c0_i32 = arith.constant 0 : i32
    %c0_i32_0 = arith.constant 0 : i32
    %c0_i32_1 = arith.constant 0 : i32
    return %c0_i32, %c0_i32_0 : i32, i32
  }
  func.func @transform_6(%arg0: i32) -> (i32, i32) {
    %c0_i32 = arith.constant 0 : i32
    %c0_i32_0 = arith.constant 0 : i32
    return %arg0, %c0_i32 : i32, i32
  }
}

</mosaic_0001>

<llo_original>
// kernel: _lambda_.5
$region0: #{_lambda_.5}
  #allocation0 [shape = 'u32[]', space=smem, size = 0x4, offset = 0x4, fixed_abs, tag = 'smem constant byte address 0x4 - core index']
  #allocation1 [shape = 'u32[144,128]{1,0:T(1,128)}', space=vmem, size = 0x12000, scoped, tag = 'internal scratch']
  %s0 = inlined_call_operand.vmem [shape: bf16[16,32], index: 0, kind: input, shape index: {}]
  %s1 = inlined_call_operand.vmem [shape: bf16[32,32], index: 1, kind: input, shape index: {}]
  %s2 = inlined_call_operand.vmem [shape: f32[1,32], index: 2, kind: input, shape index: {}]
  %s3 = inlined_call_operand.vmem [shape: f32[16,32], index: 3, kind: input, shape index: {}]
  %s4 = inlined_call_operand.vmem [shape: f32[1,32], index: 4, kind: input, shape index: {}]
  %s5 = inlined_call_operand.vmem [shape: f32[1,32], index: 5, kind: input, shape index: {}]
  %s6 = inlined_call_operand.hbm [shape: f32[16,32], index: 6, kind: output, shape index: {}]
  %s7 = sld [smem:[#allocation0]]
  $region34: #{_lambda_.5} parent=0
    _
  %s9 = ssub.s32 1, %s7
  %s10 = scalar_select 0, %s9, %s7
  $region1: #{_lambda_.5} parent=0
    #allocation2 [shape = 'u8[8192]{0}', space=vmem, size = 0x2000, scoped, tag = 'output window, operand 0, single buffered']
    #allocation3 [shape = 's32[1]{0}', space=sflag, size = 0x4, scoped, tag = 'scoped memory for _lambda_.5']
    %11 = vsyncpa [#allocation3], 0
    // Predicated region
    $region2: #{_lambda_.5} parent=1 // pred_check
      _
    $region3: #{_lambda_.5} parent=1 // pred_check_branch
      %13 = sbr.rel (0) target = $region5
    $region4: #{_lambda_.5} parent=1 // pred_region
      _
    $region5: #{_lambda_.5} parent=1 // pred_fallthru
      _
    // Predicated region
    $region6: #{_lambda_.5} parent=1 // pred_check
      _
    $region7: #{_lambda_.5} parent=1 // pred_check_branch
      %15 = sbr.rel (0) target = $region9
    $region8: #{_lambda_.5} parent=1 // pred_region
      _
    $region9: #{_lambda_.5} parent=1 // pred_fallthru
      _
    // Predicated region
    $region10: #{_lambda_.5} parent=1 // pred_check
      _
    $region11: #{_lambda_.5} parent=1 // pred_check_branch
      %17 = sbr.rel (0) target = $region13
    $region12: #{_lambda_.5} parent=1 // pred_region
      _
    $region13: #{_lambda_.5} parent=1 // pred_fallthru
      _
    // Predicated region
    $region14: #{_lambda_.5} parent=1 // pred_check
      _
    $region15: #{_lambda_.5} parent=1 // pred_check_branch
      %19 = sbr.rel (0) target = $region17
    $region16: #{_lambda_.5} parent=1 // pred_region
      _
    $region17: #{_lambda_.5} parent=1 // pred_fallthru
      _
    // Predicated region
    $region18: #{_lambda_.5} parent=1 // pred_check
      _
    $region19: #{_lambda_.5} parent=1 // pred_check_branch
      %21 = sbr.rel (0) target = $region21
    $region20: #{_lambda_.5} parent=1 // pred_region
      _
    $region21: #{_lambda_.5} parent=1 // pred_fallthru
      _
    // Predicated region
    $region22: #{_lambda_.5} parent=1 // pred_check
      _
    $region23: #{_lambda_.5} parent=1 // pred_check_branch
      %23 = sbr.rel (0) target = $region25
    $region24: #{_lambda_.5} parent=1 // pred_region
      _
    $region25: #{_lambda_.5} parent=1 // pred_fallthru
      _
    %v25 = vld [vmem:[%s0] sm:$0xf]
    %v26 = vld [vmem:[%s0 + $0x4] sm:$0xf]
    %v27 = vld [vmem:[%s1] sm:$0xf]
    %v28 = vld [vmem:[%s1 + $0x4] sm:$0xf]
    %v29 = vld [vmem:[%s1 + $0x8] sm:$0xf]
    %v30 = vld [vmem:[%s1 + $0xc] sm:$0xf]
    %v31 = vld [vmem:[%s2] sm:$0x1]
    %v33 = vlaneseq
    %v34 = vshrl.u32 %v33, 7
    %v35 = vsub.s32 0, %v34
    %v36 = vrot.slane %v31, %v35
    %v40 = vunpack.c.l.b16 %v25
    %v41 = vunpack.c.l.b16 %v26
    %v42 = vpack.c.b16 %v41, %v40
    %v47 = vunpack.c.l.b16 %v27
    %v48 = vunpack.c.l.b16 %v28
    %v49 = vunpack.c.l.b16 %v29
    %v50 = vunpack.c.l.b16 %v30
    %v51 = vpack.c.b16 %v48, %v47
    %v52 = vpack.c.b16 %v50, %v49
    %vm55 = vcmask 261120
    %v57 = vsel %vm55, %v42, 0
    %59 = vmatprep.subr.bf16.mxu0 0
    %60 = vmatpush1.bf16.msra.mxu0 %v51
    %61 = vmatprep.subr.bf16.mxu0 0
    %62 = vmatpush1.bf16.msra.mxu0 %v52
    %63 = vmatprep.subr.bf16.mxu0 0
    %64 = vmatpush1.bf16.msra.mxu0 0
    %65 = vmatprep.subr.bf16.mxu0 0
    %66 = vmatpush1.bf16.msra.mxu0 0
    %67 = vmatprep.subr.bf16.mxu0 0
    %68 = vmatpush1.bf16.msra.mxu0 0
    %69 = vmatprep.subr.bf16.mxu0 0
    %70 = vmatpush1.bf16.msra.mxu0 0
    %71 = vmatprep.subr.bf16.mxu0 0
    %72 = vmatpush1.bf16.msra.mxu0 0
    %73 = vmatprep.subr.bf16.mxu0 0
    %74 = vmatpush1.bf16.msra.mxu0 0
    %75 = vmatprep.subr.bf16.mxu0 0
    %76 = vmatpush1.bf16.msra.mxu0 0
    %77 = vmatprep.subr.bf16.mxu0 0
    %78 = vmatpush1.bf16.msra.mxu0 0
    %79 = vmatprep.subr.bf16.mxu0 0
    %80 = vmatpush1.bf16.msra.mxu0 0
    %81 = vmatprep.subr.bf16.mxu0 0
    %82 = vmatpush1.bf16.msra.mxu0 0
    %83 = vmatprep.subr.bf16.mxu0 0
    %84 = vmatpush1.bf16.msra.mxu0 0
    %85 = vmatprep.subr.bf16.mxu0 0
    %86 = vmatpush1.bf16.msra.mxu0 0
    %87 = vmatprep.subr.bf16.mxu0 0
    %88 = vmatpush1.bf16.msra.mxu0 0
    %89 = vmatprep.subr.bf16.mxu0 0
    %90 = vmatpush1.bf16.msra.mxu0 0
    %91 = vmatprep.mubr.bf16.mxu0 0
    %92 = vmatmul.mubr.bf16.gmra.mrb[0].mxu0 %v57
    %v93 = vpop.f32.mrb[0].mxu0
    %v94 = vadd.f32 %v36, %v93
    %v95 = vpop.f32.mrb[0].mxu0
    %v96 = vpop.f32.mrb[0].mxu0
    %v97 = vadd.f32 %v36, %v96
    %v98 = vpop.f32.mrb[0].mxu0
    %99 = vdwg.mxu0
    %v100 = vld [vmem:[%s3] sm:$0xff]
    %v101 = vld [vmem:[%s3 + $0x8] sm:$0xff]
    %v102 = vadd.f32 %v94, %v100
    %v103 = vadd.f32 %v97, %v101
    %v104 = vsel %vm55, %v102, 0.0
    %105 = vadd.xlane.f32.xlu0 %v104
    %v106 = vpop.xlane.xlu0 %105
    %v107 = vsel %vm55, %v103, 0.0
    %108 = vadd.xlane.f32.xlu0 %v107
    %v109 = vpop.xlane.xlu0 %108
    %v110 = vrcp.pop 32.0
    %v111 = vmul.f32 %v106, %v110
    %v112 = vmul.f32 %v109, %v110
    %v113 = vsub.f32 %v102, %v111
    %v114 = vsub.f32 %v103, %v112
    %v115 = vmul.f32 %v113, %v113
    %v116 = vmul.f32 %v114, %v114
    %v117 = vsel %vm55, %v115, 0.0
    %118 = vadd.xlane.f32.xlu0 %v117
    %v119 = vpop.xlane.xlu0 %118
    %v120 = vsel %vm55, %v116, 0.0
    %121 = vadd.xlane.f32.xlu0 %v120
    %v122 = vpop.xlane.xlu0 %121
    %v123 = vmul.f32 %v119, %v110
    %v124 = vmul.f32 %v122, %v110
    %v125 = vadd.f32 %v123, 1e-07
    %v126 = vadd.f32 %v124, 1e-07
    %v127 = vrsqrt.pop %v125
    %v128 = vrsqrt.pop %v126
    %v129 = vmul.f32 %v113, %v127
    %v130 = vmul.f32 %v114, %v128
    %v131 = vld [vmem:[%s4] sm:$0x1]
    %v133 = vlaneseq
    %v134 = vshrl.u32 %v133, 7
    %v135 = vsub.s32 0, %v134
    %v136 = vrot.slane %v131, %v135
    %v138 = vmul.f32 %v129, %v136
    %v139 = vmul.f32 %v130, %v136
    %v140 = vld [vmem:[%s5] sm:$0x1]
    %v142 = vlaneseq
    %v143 = vshrl.u32 %v142, 7
    %v144 = vsub.s32 0, %v143
    %v145 = vrot.slane %v140, %v144
    %v147 = vadd.f32 %v138, %v145
    %v148 = vadd.f32 %v139, %v145
    %149 = vst.msk [vmem:[#allocation2] sm:$0xff] %vm55, %v147
    %150 = vst.msk [vmem:[#allocation2 + $0x8] sm:$0xff] %vm55, %v148
    // Predicated region
    $region26: #{_lambda_.5} parent=1 // pred_check
      _
    $region27: #{_lambda_.5} parent=1 // pred_check_branch
      %152 = sbr.rel (0) target = $region29
    $region28: #{_lambda_.5} parent=1 // pred_region
      %s154 = ssub.s32 256, 256
      %155 = vsyncadd [#allocation3], %s154
      %s156 = sshll.u32 [#allocation2], 4
      %s157 = int_to_ptr.vmem [resolvable:$true] %s156
      %162 = dma.vmem_to_hbm [thread:$0]  %s157, 256, %s6, [#allocation3], 128, 128, 8
    $region29: #{_lambda_.5} parent=1 // pred_fallthru
      _
    // Predicated region
    $region30: #{_lambda_.5} parent=1 // pred_check
      _
    $region31: #{_lambda_.5} parent=1 // pred_check_branch
      %164 = sbr.rel (0) target = $region33
    $region32: #{_lambda_.5} parent=1 // pred_region
      %165 = dma.done [#allocation3], 256
    $region33: #{_lambda_.5} parent=1 // pred_fallthru
      _
    %166 = vsyncpa [#allocation3], 1

// kernel: _lambda_.3
$region0: #{_lambda_.3}
  #allocation0 [shape = 'u32[]', space=smem, size = 0x4, offset = 0x4, fixed_abs, tag = 'smem constant byte address 0x4 - core index']
  #allocation1 [shape = 'u32[144,128]{1,0:T(1,128)}', space=vmem, size = 0x12000, scoped, tag = 'internal scratch']
  %s0 = inlined_call_operand.hbm [shape: f32[2,8,32], index: 0, kind: input, shape index: {}]
  %s1 = inlined_call_operand.vmem [shape: bf16[32,96], index: 1, kind: input, shape index: {}]
  %s2 = inlined_call_operand.vmem [shape: f32[1,96], index: 2, kind: input, shape index: {}]
  %s3 = inlined_call_operand.vmem [shape: bf16[3,2,4,8,8], index: 3, kind: output, shape index: {}]
  %s4 = sld [smem:[#allocation0]]
  $region86: #{_lambda_.3} parent=0
    _
  %s6 = ssub.s32 1, %s4
  %s7 = scalar_select 0, %s6, %s4
  $region1: #{_lambda_.3} parent=0
    #allocation2 [shape = 'u8[8192]{0}', space=vmem, size = 0x2000, scoped, tag = 'input window, operand 0']
    #allocation3 [shape = 's32[2]{0}', space=sflag, size = 0x8, scoped, tag = 'scoped memory for _lambda_.3']
    #allocation4 [shape = 'u8[49152]{0}', space=vmem, size = 0xc000, scoped, tag = 'output window, operand 0']
    %8 = vsyncpa [#allocation3], 0
    %s9 = scalar_lea.sflag [#allocation3], 1
    %10 = vsyncpa %s9, 0
    loop: start=0, step=1, limit=4
    $region2: #{_lambda_.3} parent=1 // loop_pre_header
      _
    $region3: #{_lambda_.3} parent=1 // loop_header
      %s12 = sphi 0, %s16
      %p13 = scmp.ge.s32.totalorder %s12, 4
      %s19 = sphi 0, %s31
      %s20 = sphi 0, %s27
      %s21 = sphi 0, %s19
      %s22 = sphi 0, %s20
      %s23 = sphi 0, %s21
      %s24 = sphi 0, %s22
      %s36 = sphi 0, %s38
      %s39 = sphi 0, %s36
      %s40 = sphi 0, %s39
      %s56 = sphi 0, %s40
      %s60 = sphi 0, %s60
      %s62 = sphi 0, %s60
      %s63 = sphi 0, %s62
      %s77 = sphi 0, %s63
      %s81 = sphi 0, %s81
      %s83 = sphi 0, %s81
      %s84 = sphi 0, %s83
      %s98 = sphi 0, %s84
      %s106 = sphi 0, %s108
      %s109 = sphi 0, %s106
      %s110 = sphi 0, %s109
      %s126 = sphi 0, %s110
    $region4: #{_lambda_.3} parent=1 // loop_header_branch
      %15 = sbr.rel (%p13) target = $region8
    $region5: #{_lambda_.3} parent=1 // loop_body
      %s17 = ssub.s32 %s12, 1
      %s18 = ssub.s32 %s12, 2
      %s25 = sadd.s32 1, %s20
      %p26 = scmp.ge.s32.totalorder %s25, 1
      %s27 = scalar_select %p26, 0, %s25
      %s28 = sadd.s32 1, %s19
      %s29 = scalar_select %p26, %s28, %s19
      %p30 = scmp.ge.s32.totalorder %s29, 2
      %s31 = scalar_select %p30, 0, %s29
      %s32 = ssub.s32 %s19, %s31
      %s33 = ssub.s32 %s20, %s27
      %s34 = sor.u32 %s32, %s33
      %p35 = scmp.eq.s32.totalorder %s34, 0
      %s37 = sadd.s32 %s36, 1
      %s38 = scalar_select %p35, %s36, %s37
      %p41 = pneg %p35
      %p42 = scmp.eq.s32.totalorder %s12, 1
      %p43 = por %p41, %p42
      %p44 = scmp.ne.s32.totalorder %s36, %s39
      %p45 = scmp.eq.s32.totalorder %s12, 0
      %p46 = por %p44, %p45
      %p47 = scmp.ne.s32.totalorder %s36, %s39
      %p48 = scmp.eq.s32.totalorder %s17, 1
      %p49 = por %p47, %p48
      %p50 = scmp.ne.s32.totalorder %s39, %s40
      %p51 = scmp.eq.s32.totalorder %s17, 0
      %p52 = por %p50, %p51
      %p53 = scmp.ne.s32.totalorder %s39, %s40
      %p54 = scmp.eq.s32.totalorder %s18, 1
      %p55 = por %p53, %p54
      %p57 = scmp.ne.s32.totalorder %s40, %s56
      %p58 = scmp.eq.s32.totalorder %s18, 0
      %p59 = por %p57, %p58
      %s61 = sadd.s32 %s60, 1
      %p64 = scmp.eq.s32.totalorder %s12, 1
      %p65 = scmp.ne.s32.totalorder %s60, %s62
      %p66 = scmp.eq.s32.totalorder %s12, 0
      %p67 = por %p65, %p66
      %p68 = scmp.ne.s32.totalorder %s60, %s62
      %p69 = scmp.eq.s32.totalorder %s17, 1
      %p70 = por %p68, %p69
      %p71 = scmp.ne.s32.totalorder %s62, %s63
      %p72 = scmp.eq.s32.totalorder %s17, 0
      %p73 = por %p71, %p72
      %p74 = scmp.ne.s32.totalorder %s62, %s63
      %p75 = scmp.eq.s32.totalorder %s18, 1
      %p76 = por %p74, %p75
      %p78 = scmp.ne.s32.totalorder %s63, %s77
      %p79 = scmp.eq.s32.totalorder %s18, 0
      %p80 = por %p78, %p79
      %s82 = sadd.s32 %s81, 1
      %p85 = scmp.eq.s32.totalorder %s12, 1
      %p86 = scmp.ne.s32.totalorder %s81, %s83
      %p87 = scmp.eq.s32.totalorder %s12, 0
      %p88 = por %p86, %p87
      %p89 = scmp.ne.s32.totalorder %s81, %s83
      %p90 = scmp.eq.s32.totalorder %s17, 1
      %p91 = por %p89, %p90
      %p92 = scmp.ne.s32.totalorder %s83, %s84
      %p93 = scmp.eq.s32.totalorder %s17, 0
      %p94 = por %p92, %p93
      %p95 = scmp.ne.s32.totalorder %s83, %s84
      %p96 = scmp.eq.s32.totalorder %s18, 1
      %p97 = por %p95, %p96
      %p99 = scmp.ne.s32.totalorder %s84, %s98
      %p100 = scmp.eq.s32.totalorder %s18, 0
      %p101 = por %p99, %p100
      %s102 = ssub.s32 %s19, %s31
      %s103 = ssub.s32 %s20, %s27
      %s104 = sor.u32 %s102, %s103
      %p105 = scmp.eq.s32.totalorder %s104, 0
      %s107 = sadd.s32 %s106, 1
      %s108 = scalar_select %p105, %s106, %s107
      %p111 = pneg %p105
      %p112 = scmp.eq.s32.totalorder %s12, 1
      %p113 = por %p111, %p112
      %p114 = scmp.ne.s32.totalorder %s106, %s109
      %p115 = scmp.eq.s32.totalorder %s12, 0
      %p116 = por %p114, %p115
      %p117 = scmp.ne.s32.totalorder %s106, %s109
      %p118 = scmp.eq.s32.totalorder %s17, 1
      %p119 = por %p117, %p118
      %p120 = scmp.ne.s32.totalorder %s109, %s110
      %p121 = scmp.eq.s32.totalorder %s17, 0
      %p122 = por %p120, %p121
      %p123 = scmp.ne.s32.totalorder %s109, %s110
      %p124 = scmp.eq.s32.totalorder %s18, 1
      %p125 = por %p123, %p124
      %p127 = scmp.ne.s32.totalorder %s110, %s126
      %p128 = scmp.eq.s32.totalorder %s18, 0
      %p129 = por %p127, %p128
      %p130 = scmp.le.s32.totalorder 1, %s12
      %p131 = scmp.lt.s32.totalorder %s12, 3
      %p132 = pnand %p130, %p131
      %p133 = pneg %p132
      // Predicated region
      $region9: #{_lambda_.3} parent=5 // pred_check
        _
      $region10: #{_lambda_.3} parent=5 // pred_check_branch
        %135 = sbr.rel (%p132) target = $region12
      $region11: #{_lambda_.3} parent=5 // pred_region
        %s136 = ssub.s32 %s12, 1
        // Predicated region
        $region13: #{_lambda_.3} parent=11 // pred_check
          %p137 = pneg %p73
        $region14: #{_lambda_.3} parent=11 // pred_check_branch
          %139 = sbr.rel (%p137) target = $region16
        $region15: #{_lambda_.3} parent=11 // pred_region
          _
        $region16: #{_lambda_.3} parent=11 // pred_fallthru
          _
        // Predicated region
        $region17: #{_lambda_.3} parent=11 // pred_check
          %p140 = pneg %p94
        $region18: #{_lambda_.3} parent=11 // pred_check_branch
          %142 = sbr.rel (%p140) target = $region20
        $region19: #{_lambda_.3} parent=11 // pred_region
          _
        $region20: #{_lambda_.3} parent=11 // pred_fallthru
          _
      $region12: #{_lambda_.3} parent=5 // pred_fallthru
        _
      %p143 = scmp.lt.s32.totalorder %s12, 2
      // Predicated region
      $region21: #{_lambda_.3} parent=5 // pred_check
        %p144 = pneg %p143
      $region22: #{_lambda_.3} parent=5 // pred_check_branch
        %146 = sbr.rel (%p144) target = $region24
      $region23: #{_lambda_.3} parent=5 // pred_region
        // Predicated region
        $region25: #{_lambda_.3} parent=23 // pred_check
          %p147 = pneg %p46
        $region26: #{_lambda_.3} parent=23 // pred_check_branch
          %149 = sbr.rel (%p147) target = $region28
        $region27: #{_lambda_.3} parent=23 // pred_region
          %s150 = sand.u32 %s36, 1
          %s151 = scalar_lea.sflag [#allocation3], %s150
          %s152 = sand.u32 %s36, 1
          %s153 = smul.addr %s152, 8
          %s154 = scalar_lea.vmem [#allocation2], %s153
          %s156 = ssub.s32 128, 128
          %157 = vsyncadd %s151, %s156
          %s158 = sadd.s32 %s20, %s19
          %s159 = smul.addr %s158, 128
          %s160 = scalar_lea.hbm %s0, %s159
          %s162 = sshll.u32 %s154, 4
          %s163 = int_to_ptr.vmem [resolvable:$true] %s162
          %165 = dma.hbm_to_vmem [thread:$0]  %s160, 128, %s163, %s151
        $region28: #{_lambda_.3} parent=23 // pred_fallthru
          _
      $region24: #{_lambda_.3} parent=5 // pred_fallthru
        _
      %p166 = scmp.le.s32.totalorder 1, %s12
      %p167 = scmp.lt.s32.totalorder %s12, 3
      %p168 = pnand %p166, %p167
      %p169 = pneg %p168
      // Predicated region
      $region29: #{_lambda_.3} parent=5 // pred_check
        _
      $region30: #{_lambda_.3} parent=5 // pred_check_branch
        %171 = sbr.rel (%p168) target = $region32
      $region31: #{_lambda_.3} parent=5 // pred_region
        %s172 = ssub.s32 %s12, 1
        %s173 = sand.u32 %s39, 1
        %s174 = scalar_lea.sflag [#allocation3], %s173
        %s175 = sand.u32 %s39, 1
        %s176 = smul.addr %s175, 8
        %s177 = scalar_lea.vmem [#allocation2], %s176
        // Predicated region
        $region33: #{_lambda_.3} parent=31 // pred_check
          %p178 = pneg %p52
        $region34: #{_lambda_.3} parent=31 // pred_check_branch
          %180 = sbr.rel (%p178) target = $region36
        $region35: #{_lambda_.3} parent=31 // pred_region
          %181 = dma.done %s174, 128
        $region36: #{_lambda_.3} parent=31 // pred_fallthru
          _
        %s182 = sand.u32 %s39, 1
        %s183 = scalar_lea.sflag [#allocation3], %s182
        %s184 = sand.u32 %s39, 1
        %s185 = smul.addr %s184, 8
        %s186 = scalar_lea.vmem [#allocation2], %s185
        %p187 = pneg %p52
        %p188 = pneg %p49
        %p189 = pneg %p73
        %p190 = pneg %p70
        %p191 = pneg %p94
        %p192 = pneg %p91
        %p193 = pneg %p122
        %p194 = pneg %p119
        %s195 = sand.u32 %s109, 1
        %s196 = sand.u32 %s109, 1
        %s197 = smul.addr %s196, 48
        %s198 = scalar_lea.vmem [#allocation4], %s197
        %v200 = vld [vmem:[%s177] sm:$0xff]
        %v201 = vpack.c.bf16 %v200, %v200
        %v202 = vld [vmem:[%s1] sm:$0xf]
        %v203 = vld [vmem:[%s1 + $0x4] sm:$0xf]
        %v204 = vld [vmem:[%s1 + $0x8] sm:$0xf]
        %v205 = vld [vmem:[%s1 + $0xc] sm:$0xf]
        %v206 = vld [vmem:[%s2] sm:$0x1]
        %v208 = vlaneseq
        %v209 = vshrl.u32 %v208, 7
        %v210 = vsub.s32 0, %v209
        %v211 = vrot.slane %v206, %v210
        %v217 = vunpack.c.l.b16 %v202
        %v218 = vunpack.c.l.b16 %v203
        %v219 = vunpack.c.l.b16 %v204
        %v220 = vunpack.c.l.b16 %v205
        %v221 = vpack.c.b16 %v218, %v217
        %v222 = vpack.c.b16 %v220, %v219
        %vm225 = vcmask 261120
        %v227 = vsel %vm225, %v201, 0
        %229 = vmatprep.subr.bf16.mxu0 0
        %230 = vmatpush1.bf16.msra.mxu0 %v221
        %231 = vmatprep.subr.bf16.mxu0 0
        %232 = vmatpush1.bf16.msra.mxu0 %v222
        %233 = vmatprep.subr.bf16.mxu0 0
        %234 = vmatpush1.bf16.msra.mxu0 0
        %235 = vmatprep.subr.bf16.mxu0 0
        %236 = vmatpush1.bf16.msra.mxu0 0
        %237 = vmatprep.subr.bf16.mxu0 0
        %238 = vmatpush1.bf16.msra.mxu0 0
        %239 = vmatprep.subr.bf16.mxu0 0
        %240 = vmatpush1.bf16.msra.mxu0 0
        %241 = vmatprep.subr.bf16.mxu0 0
        %242 = vmatpush1.bf16.msra.mxu0 0
        %243 = vmatprep.subr.bf16.mxu0 0
        %244 = vmatpush1.bf16.msra.mxu0 0
        %245 = vmatprep.subr.bf16.mxu0 0
        %246 = vmatpush1.bf16.msra.mxu0 0
        %247 = vmatprep.subr.bf16.mxu0 0
        %248 = vmatpush1.bf16.msra.mxu0 0
        %249 = vmatprep.subr.bf16.mxu0 0
        %250 = vmatpush1.bf16.msra.mxu0 0
        %251 = vmatprep.subr.bf16.mxu0 0
        %252 = vmatpush1.bf16.msra.mxu0 0
        %253 = vmatprep.subr.bf16.mxu0 0
        %254 = vmatpush1.bf16.msra.mxu0 0
        %255 = vmatprep.subr.bf16.mxu0 0
        %256 = vmatpush1.bf16.msra.mxu0 0
        %257 = vmatprep.subr.bf16.mxu0 0
        %258 = vmatpush1.bf16.msra.mxu0 0
        %259 = vmatprep.subr.bf16.mxu0 0
        %260 = vmatpush1.bf16.msra.mxu0 0
        %261 = vmatprep.mubr.bf16.mxu0 0
        %262 = vmatmul.mubr.bf16.gmra.mrb[0].mxu0 %v227
        %v263 = vpop.f32.mrb[0].mxu0
        %v264 = vadd.f32 %v211, %v263
        %v265 = vpop.f32.mrb[0].mxu0
        %v266 = vpop.f32.mrb[0].mxu0
        %v267 = vpop.f32.mrb[0].mxu0
        %268 = vdwg.mxu0
        %v269 = vpack.c.bf16 %v264, %v264
        %vm270 = vcmask 60416
        %271 = vst.msk [vmem:[%s198] sm:$0xf] %vm270, %v269
        %v273 = vunpack.c.l.b16 %v269
        %v274 = vpack.c.b16 %v273, %v273
        %275 = vrot.lane.b32.xlu0 %v274, 120
        %v276 = vpop.permute.xlu0 %275
        %s278 = scalar_lea.vmem %s198, 4 [#allocation4]
        %279 = vst.msk [vmem:[%s278] sm:$0xf] %vm270, %v276
        %280 = vrot.lane.b32.xlu0 %v274, 112
        %v281 = vpop.permute.xlu0 %280
        %s283 = scalar_lea.vmem %s198, 8 [#allocation4]
        %284 = vst.msk [vmem:[%s283] sm:$0xf] %vm270, %v281
        %285 = vrot.lane.b32.xlu0 %v274, 104
        %v286 = vpop.permute.xlu0 %285
        %s288 = scalar_lea.vmem %s198, 12 [#allocation4]
        %289 = vst.msk [vmem:[%s288] sm:$0xf] %vm270, %v286
        %290 = vrot.lane.b32.xlu0 %v274, 96
        %v291 = vpop.permute.xlu0 %290
        %s293 = scalar_lea.vmem %s198, 16 [#allocation4]
        %294 = vst.msk [vmem:[%s293] sm:$0xf] %vm270, %v291
        %295 = vrot.lane.b32.xlu0 %v274, 88
        %v296 = vpop.permute.xlu0 %295
        %s298 = scalar_lea.vmem %s198, 20 [#allocation4]
        %299 = vst.msk [vmem:[%s298] sm:$0xf] %vm270, %v296
        %300 = vrot.lane.b32.xlu0 %v274, 80
        %v301 = vpop.permute.xlu0 %300
        %s303 = scalar_lea.vmem %s198, 24 [#allocation4]
        %304 = vst.msk [vmem:[%s303] sm:$0xf] %vm270, %v301
        %305 = vrot.lane.b32.xlu0 %v274, 72
        %v306 = vpop.permute.xlu0 %305
        %s308 = scalar_lea.vmem %s198, 28 [#allocation4]
        %309 = vst.msk [vmem:[%s308] sm:$0xf] %vm270, %v306
        %310 = vrot.lane.b32.xlu0 %v274, 64
        %v311 = vpop.permute.xlu0 %310
        %s313 = scalar_lea.vmem %s198, 32 [#allocation4]
        %314 = vst.msk [vmem:[%s313] sm:$0xf] %vm270, %v311
        %315 = vrot.lane.b32.xlu0 %v274, 56
        %v316 = vpop.permute.xlu0 %315
        %s318 = scalar_lea.vmem %s198, 36 [#allocation4]
        %319 = vst.msk [vmem:[%s318] sm:$0xf] %vm270, %v316
        %320 = vrot.lane.b32.xlu0 %v274, 48
        %v321 = vpop.permute.xlu0 %320
        %s323 = scalar_lea.vmem %s198, 40 [#allocation4]
        %324 = vst.msk [vmem:[%s323] sm:$0xf] %vm270, %v321
        %325 = vrot.lane.b32.xlu0 %v274, 40
        %v326 = vpop.permute.xlu0 %325
        %s328 = scalar_lea.vmem %s198, 44 [#allocation4]
        %329 = vst.msk [vmem:[%s328] sm:$0xf] %vm270, %v326
        %s330 = sand.u32 %s109, 1
        %s331 = sand.u32 %s109, 1
        %s332 = smul.addr %s331, 48
        %s333 = scalar_lea.vmem [#allocation4], %s332
        // Predicated region
        $region37: #{_lambda_.3} parent=31 // pred_check
          %p334 = pneg %p119
        $region38: #{_lambda_.3} parent=31 // pred_check_branch
          %336 = sbr.rel (%p334) target = $region40
        $region39: #{_lambda_.3} parent=31 // pred_region
          %s337 = smul.addr %s21, 4
          %s338 = sadd.s32 %s22, %s337
          %s339 = smul.addr %s338, 4
          %s340 = scalar_lea.vmem %s3, %s339
          // Predicated region
          $region41: #{_lambda_.3} parent=39 // pred_check
            _
          $region42: #{_lambda_.3} parent=39 // pred_check_branch
            %342 = sbr.rel (0) target = $region44
          $region43: #{_lambda_.3} parent=39 // pred_region
            // Predicated region
            $region45: #{_lambda_.3} parent=43 // pred_check
              _
            $region46: #{_lambda_.3} parent=43 // pred_check_branch
              %344 = sbr.rel target = $region48
            $region47: #{_lambda_.3} parent=43 // pred_region
              // Predicated region
              $region60: #{_lambda_.3} parent=47 // pred_check
                _
              $region61: #{_lambda_.3} parent=47 // pred_check_branch
                %381 = sbr.rel (0) target = $region63
              $region62: #{_lambda_.3} parent=47 // pred_region
                loop: start=0, step=1, limit=1
                $region64: #{_lambda_.3} parent=62 // loop_pre_header
                  _
                $region65: #{_lambda_.3} parent=62 // loop_header
                  %s383 = sphi 0, %s387
                  %p384 = scmp.ge.s32.totalorder %s383, 1
                  %s388 = sphi %s333, %s333
                  %s389 = sphi %s340, %s340
                $region66: #{_lambda_.3} parent=62 // loop_header_branch
                  %386 = sbr.rel (%p384) target = $region70
                $region67: #{_lambda_.3} parent=62 // loop_body
                  _
                $region68: #{_lambda_.3} parent=62 // loop_footer
                  %s387 = sadd.s32 1, %s383
                $region69: #{_lambda_.3} parent=62 // loop_footer_branch
                  %382 = sbr.rel target = $region65
                $region70: #{_lambda_.3} parent=62 // loop_exit
                  _
                loop: start=0, step=1, limit=1
                $region71: #{_lambda_.3} parent=62 // loop_pre_header
                  _
                $region72: #{_lambda_.3} parent=62 // loop_header
                  %s392 = sphi 0, %s396
                  %p393 = scmp.ge.s32.totalorder %s392, 1
                  %s397 = sphi %s333, %s333
                  %s398 = sphi %s340, %s340
                $region73: #{_lambda_.3} parent=62 // loop_header_branch
                  %395 = sbr.rel (%p393) target = $region77
                $region74: #{_lambda_.3} parent=62 // loop_body
                  %v399 = vld [vmem:[%s397] sm:$0xf]
                  %400 = vst [vmem:[%s398] sm:$0xf] %v399
                  %v401 = vld [vmem:[%s397 + $0x4] sm:$0xf]
                  %402 = vst [vmem:[%s398 + $0x4] sm:$0xf] %v401
                  %v403 = vld [vmem:[%s397 + $0x8] sm:$0xf]
                  %404 = vst [vmem:[%s398 + $0x8] sm:$0xf] %v403
                  %v405 = vld [vmem:[%s397 + $0xc] sm:$0xf]
                  %406 = vst [vmem:[%s398 + $0xc] sm:$0xf] %v405
                  %v407 = vld [vmem:[%s397 + $0x10] sm:$0xf]
                  %408 = vst [vmem:[%s398 + $0x20] sm:$0xf] %v407
                  %v409 = vld [vmem:[%s397 + $0x14] sm:$0xf]
                  %410 = vst [vmem:[%s398 + $0x24] sm:$0xf] %v409
                  %v411 = vld [vmem:[%s397 + $0x18] sm:$0xf]
                  %412 = vst [vmem:[%s398 + $0x28] sm:$0xf] %v411
                  %v413 = vld [vmem:[%s397 + $0x1c] sm:$0xf]
                  %414 = vst [vmem:[%s398 + $0x2c] sm:$0xf] %v413
                  %v415 = vld [vmem:[%s397 + $0x20] sm:$0xf]
                  %416 = vst [vmem:[%s398 + $0x40] sm:$0xf] %v415
                  %v417 = vld [vmem:[%s397 + $0x24] sm:$0xf]
                  %418 = vst [vmem:[%s398 + $0x44] sm:$0xf] %v417
                  %v419 = vld [vmem:[%s397 + $0x28] sm:$0xf]
                  %420 = vst [vmem:[%s398 + $0x48] sm:$0xf] %v419
                  %v421 = vld [vmem:[%s397 + $0x2c] sm:$0xf]
                  %422 = vst [vmem:[%s398 + $0x4c] sm:$0xf] %v421
                $region75: #{_lambda_.3} parent=62 // loop_footer
                  %s396 = sadd.s32 1, %s392
                $region76: #{_lambda_.3} parent=62 // loop_footer_branch
                  %391 = sbr.rel target = $region72
                $region77: #{_lambda_.3} parent=62 // loop_exit
                  _
              $region63: #{_lambda_.3} parent=47 // pred_fallthru
                _
            $region48: #{_lambda_.3} parent=43 // pred_fallthru
              _
            // Predicated region
            $region49: #{_lambda_.3} parent=43 // pred_check
              _
            $region50: #{_lambda_.3} parent=43 // pred_check_branch
              %346 = sbr.rel (0) target = $region52
            $region51: #{_lambda_.3} parent=43 // pred_region
              loop: start=0, step=1, limit=1
              $region53: #{_lambda_.3} parent=51 // loop_pre_header
                _
              $region54: #{_lambda_.3} parent=51 // loop_header
                %s349 = sphi 0, %s353
                %p350 = scmp.ge.s32.totalorder %s349, 1
                %s354 = sphi %s333, %s333
                %s355 = sphi %s340, %s340
              $region55: #{_lambda_.3} parent=51 // loop_header_branch
                %352 = sbr.rel (%p350) target = $region59
              $region56: #{_lambda_.3} parent=51 // loop_body
                %v356 = vld [vmem:[%s354] sm:$0xf]
                %357 = vst [vmem:[%s355] sm:$0xf] %v356
                %v358 = vld [vmem:[%s354 + $0x4] sm:$0xf]
                %359 = vst [vmem:[%s355 + $0x4] sm:$0xf] %v358
                %v360 = vld [vmem:[%s354 + $0x8] sm:$0xf]
                %361 = vst [vmem:[%s355 + $0x8] sm:$0xf] %v360
                %v362 = vld [vmem:[%s354 + $0xc] sm:$0xf]
                %363 = vst [vmem:[%s355 + $0xc] sm:$0xf] %v362
                %v364 = vld [vmem:[%s354 + $0x10] sm:$0xf]
                %365 = vst [vmem:[%s355 + $0x20] sm:$0xf] %v364
                %v366 = vld [vmem:[%s354 + $0x14] sm:$0xf]
                %367 = vst [vmem:[%s355 + $0x24] sm:$0xf] %v366
                %v368 = vld [vmem:[%s354 + $0x18] sm:$0xf]
                %369 = vst [vmem:[%s355 + $0x28] sm:$0xf] %v368
                %v370 = vld [vmem:[%s354 + $0x1c] sm:$0xf]
                %371 = vst [vmem:[%s355 + $0x2c] sm:$0xf] %v370
                %v372 = vld [vmem:[%s354 + $0x20] sm:$0xf]
                %373 = vst [vmem:[%s355 + $0x40] sm:$0xf] %v372
                %v374 = vld [vmem:[%s354 + $0x24] sm:$0xf]
                %375 = vst [vmem:[%s355 + $0x44] sm:$0xf] %v374
                %v376 = vld [vmem:[%s354 + $0x28] sm:$0xf]
                %377 = vst [vmem:[%s355 + $0x48] sm:$0xf] %v376
                %v378 = vld [vmem:[%s354 + $0x2c] sm:$0xf]
                %379 = vst [vmem:[%s355 + $0x4c] sm:$0xf] %v378
              $region57: #{_lambda_.3} parent=51 // loop_footer
                %s353 = sadd.s32 1, %s349
              $region58: #{_lambda_.3} parent=51 // loop_footer_branch
                %348 = sbr.rel target = $region54
              $region59: #{_lambda_.3} parent=51 // loop_exit
                _
            $region52: #{_lambda_.3} parent=43 // pred_fallthru
              _
          $region44: #{_lambda_.3} parent=39 // pred_fallthru
            _
          %423 = vnop
        $region40: #{_lambda_.3} parent=31 // pred_fallthru
          _
      $region32: #{_lambda_.3} parent=5 // pred_fallthru
        _
      %p424 = scmp.le.s32.totalorder 2, %s12
      // Predicated region
      $region78: #{_lambda_.3} parent=5 // pred_check
        %p425 = pneg %p424
      $region79: #{_lambda_.3} parent=5 // pred_check_branch
        %427 = sbr.rel (%p425) target = $region81
      $region80: #{_lambda_.3} parent=5 // pred_region
        %s428 = ssub.s32 %s12, 2
        // Predicated region
        $region82: #{_lambda_.3} parent=80 // pred_check
          %p429 = pneg %p125
        $region83: #{_lambda_.3} parent=80 // pred_check_branch
          %431 = sbr.rel (%p429) target = $region85
        $region84: #{_lambda_.3} parent=80 // pred_region
          %s432 = sand.u32 %s110, 1
          %s433 = sand.u32 %s110, 1
          %s434 = smul.addr %s433, 48
          %s435 = scalar_lea.vmem [#allocation4], %s434
        $region85: #{_lambda_.3} parent=80 // pred_fallthru
          _
      $region81: #{_lambda_.3} parent=5 // pred_fallthru
        _
    $region6: #{_lambda_.3} parent=1 // loop_footer
      %s16 = sadd.s32 1, %s12
    $region7: #{_lambda_.3} parent=1 // loop_footer_branch
      %11 = sbr.rel target = $region3
    $region8: #{_lambda_.3} parent=1 // loop_exit
      _
    %436 = vsyncpa [#allocation3], 1
    %s437 = scalar_lea.sflag [#allocation3], 1
    %438 = vsyncpa %s437, 1

// kernel: _lambda_.4
$region0: #{_lambda_.4}
  #allocation0 [shape = 'u32[]', space=smem, size = 0x4, offset = 0x4, fixed_abs, tag = 'smem constant byte address 0x4 - core index']
  #allocation1 [shape = 'u32[144,128]{1,0:T(1,128)}', space=vmem, size = 0x12000, scoped, tag = 'internal scratch']
  #allocation2 [shape = 'f32[4,8,1]{2,1,0:T(8,128)}', space=vmem, size = 0x4000, scoped, tag = 'scratch operand']
  #allocation3 [shape = 'f32[4,8,1]{2,1,0:T(8,128)}', space=vmem, size = 0x4000, scoped, tag = 'scratch operand']
  #allocation4 [shape = 'f32[4,8,8]{2,1,0:T(8,128)}', space=vmem, size = 0x4000, scoped, tag = 'scratch operand']
  %s0 = inlined_call_operand.vmem [shape: bf16[3,2,4,8,8], index: 0, kind: input, shape index: {}, may-alias: {0,1,2}]
  %s1 = inlined_call_operand.vmem [shape: bf16[3,2,4,8,8], index: 1, kind: input, shape index: {}, may-alias: {0,1,2}]
  %s2 = inlined_call_operand.vmem [shape: bf16[3,2,4,8,8], index: 2, kind: input, shape index: {}, may-alias: {0,1,2}]
  %s3 = inlined_call_operand.vmem [shape: f32[2,1,8], index: 3, kind: input, shape index: {}]
  %s4 = inlined_call_operand.vmem [shape: bf16[2,8,32], index: 4, kind: output, shape index: {}]
  %s5 = sld [smem:[#allocation0]]
  $region57: #{_lambda_.4} parent=0
    _
  %s7 = ssub.s32 1, %s5
  %s8 = scalar_select 0, %s7, %s5
  loop: start=0, step=1, limit=4
  $region2: #{_lambda_.4} parent=0 // loop_pre_header
    _
  $region3: #{_lambda_.4} parent=0 // loop_header
    %s10 = sphi 0, %s14
    %p11 = scmp.ge.s32.totalorder %s10, 4
    %s17 = sphi 0, %s36
    %s18 = sphi 0, %s32
    %s19 = sphi 0, %s28
    %s20 = sphi 0, %s17
    %s21 = sphi 0, %s18
    %s22 = sphi 0, %s19
    %s23 = sphi 0, %s20
    %s24 = sphi 0, %s21
    %s25 = sphi 0, %s22
    %s41 = sphi 0, %s43
    %s44 = sphi 0, %s41
    %s45 = sphi 0, %s44
    %s61 = sphi 0, %s45
    %s69 = sphi 0, %s71
    %s72 = sphi 0, %s69
    %s73 = sphi 0, %s72
    %s89 = sphi 0, %s73
    %s97 = sphi 0, %s99
    %s100 = sphi 0, %s97
    %s101 = sphi 0, %s100
    %s117 = sphi 0, %s101
    %s125 = sphi 0, %s127
    %s128 = sphi 0, %s125
    %s129 = sphi 0, %s128
    %s145 = sphi 0, %s129
    %s153 = sphi 0, %s155
    %s156 = sphi 0, %s153
    %s157 = sphi 0, %s156
    %s173 = sphi 0, %s157
  $region4: #{_lambda_.4} parent=0 // loop_header_branch
    %13 = sbr.rel (%p11) target = $region8
  $region5: #{_lambda_.4} parent=0 // loop_body
    %s15 = ssub.s32 %s10, 1
    %s16 = ssub.s32 %s10, 2
    %s26 = sadd.s32 1, %s19
    %p27 = scmp.ge.s32.totalorder %s26, 1
    %s28 = scalar_select %p27, 0, %s26
    %s29 = sadd.s32 1, %s18
    %s30 = scalar_select %p27, %s29, %s18
    %p31 = scmp.ge.s32.totalorder %s30, 1
    %s32 = scalar_select %p31, 0, %s30
    %s33 = sadd.s32 1, %s17
    %s34 = scalar_select %p31, %s33, %s17
    %p35 = scmp.ge.s32.totalorder %s34, 2
    %s36 = scalar_select %p35, 0, %s34
    %s37 = ssub.s32 %s17, %s36
    %s38 = ssub.s32 %s18, %s32
    %s39 = sor.u32 %s37, %s38
    %p40 = scmp.eq.s32.totalorder %s39, 0
    %s42 = sadd.s32 %s41, 1
    %s43 = scalar_select %p40, %s41, %s42
    %p46 = pneg %p40
    %p47 = scmp.eq.s32.totalorder %s10, 1
    %p48 = por %p46, %p47
    %p49 = scmp.ne.s32.totalorder %s41, %s44
    %p50 = scmp.eq.s32.totalorder %s10, 0
    %p51 = por %p49, %p50
    %p52 = scmp.ne.s32.totalorder %s41, %s44
    %p53 = scmp.eq.s32.totalorder %s15, 1
    %p54 = por %p52, %p53
    %p55 = scmp.ne.s32.totalorder %s44, %s45
    %p56 = scmp.eq.s32.totalorder %s15, 0
    %p57 = por %p55, %p56
    %p58 = scmp.ne.s32.totalorder %s44, %s45
    %p59 = scmp.eq.s32.totalorder %s16, 1
    %p60 = por %p58, %p59
    %p62 = scmp.ne.s32.totalorder %s45, %s61
    %p63 = scmp.eq.s32.totalorder %s16, 0
    %p64 = por %p62, %p63
    %s65 = ssub.s32 %s17, %s36
    %s66 = ssub.s32 %s19, %s28
    %s67 = sor.u32 %s65, %s66
    %p68 = scmp.eq.s32.totalorder %s67, 0
    %s70 = sadd.s32 %s69, 1
    %s71 = scalar_select %p68, %s69, %s70
    %p74 = pneg %p68
    %p75 = scmp.eq.s32.totalorder %s10, 1
    %p76 = por %p74, %p75
    %p77 = scmp.ne.s32.totalorder %s69, %s72
    %p78 = scmp.eq.s32.totalorder %s10, 0
    %p79 = por %p77, %p78
    %p80 = scmp.ne.s32.totalorder %s69, %s72
    %p81 = scmp.eq.s32.totalorder %s15, 1
    %p82 = por %p80, %p81
    %p83 = scmp.ne.s32.totalorder %s72, %s73
    %p84 = scmp.eq.s32.totalorder %s15, 0
    %p85 = por %p83, %p84
    %p86 = scmp.ne.s32.totalorder %s72, %s73
    %p87 = scmp.eq.s32.totalorder %s16, 1
    %p88 = por %p86, %p87
    %p90 = scmp.ne.s32.totalorder %s73, %s89
    %p91 = scmp.eq.s32.totalorder %s16, 0
    %p92 = por %p90, %p91
    %s93 = ssub.s32 %s17, %s36
    %s94 = ssub.s32 %s19, %s28
    %s95 = sor.u32 %s93, %s94
    %p96 = scmp.eq.s32.totalorder %s95, 0
    %s98 = sadd.s32 %s97, 1
    %s99 = scalar_select %p96, %s97, %s98
    %p102 = pneg %p96
    %p103 = scmp.eq.s32.totalorder %s10, 1
    %p104 = por %p102, %p103
    %p105 = scmp.ne.s32.totalorder %s97, %s100
    %p106 = scmp.eq.s32.totalorder %s10, 0
    %p107 = por %p105, %p106
    %p108 = scmp.ne.s32.totalorder %s97, %s100
    %p109 = scmp.eq.s32.totalorder %s15, 1
    %p110 = por %p108, %p109
    %p111 = scmp.ne.s32.totalorder %s100, %s101
    %p112 = scmp.eq.s32.totalorder %s15, 0
    %p113 = por %p111, %p112
    %p114 = scmp.ne.s32.totalorder %s100, %s101
    %p115 = scmp.eq.s32.totalorder %s16, 1
    %p116 = por %p114, %p115
    %p118 = scmp.ne.s32.totalorder %s101, %s117
    %p119 = scmp.eq.s32.totalorder %s16, 0
    %p120 = por %p118, %p119
    %s121 = ssub.s32 %s17, %s36
    %s122 = ssub.s32 %s19, %s28
    %s123 = sor.u32 %s121, %s122
    %p124 = scmp.eq.s32.totalorder %s123, 0
    %s126 = sadd.s32 %s125, 1
    %s127 = scalar_select %p124, %s125, %s126
    %p130 = pneg %p124
    %p131 = scmp.eq.s32.totalorder %s10, 1
    %p132 = por %p130, %p131
    %p133 = scmp.ne.s32.totalorder %s125, %s128
    %p134 = scmp.eq.s32.totalorder %s10, 0
    %p135 = por %p133, %p134
    %p136 = scmp.ne.s32.totalorder %s125, %s128
    %p137 = scmp.eq.s32.totalorder %s15, 1
    %p138 = por %p136, %p137
    %p139 = scmp.ne.s32.totalorder %s128, %s129
    %p140 = scmp.eq.s32.totalorder %s15, 0
    %p141 = por %p139, %p140
    %p142 = scmp.ne.s32.totalorder %s128, %s129
    %p143 = scmp.eq.s32.totalorder %s16, 1
    %p144 = por %p142, %p143
    %p146 = scmp.ne.s32.totalorder %s129, %s145
    %p147 = scmp.eq.s32.totalorder %s16, 0
    %p148 = por %p146, %p147
    %s149 = ssub.s32 %s17, %s36
    %s150 = ssub.s32 %s18, %s32
    %s151 = sor.u32 %s149, %s150
    %p152 = scmp.eq.s32.totalorder %s151, 0
    %s154 = sadd.s32 %s153, 1
    %s155 = scalar_select %p152, %s153, %s154
    %p158 = pneg %p152
    %p159 = scmp.eq.s32.totalorder %s10, 1
    %p160 = por %p158, %p159
    %p161 = scmp.ne.s32.totalorder %s153, %s156
    %p162 = scmp.eq.s32.totalorder %s10, 0
    %p163 = por %p161, %p162
    %p164 = scmp.ne.s32.totalorder %s153, %s156
    %p165 = scmp.eq.s32.totalorder %s15, 1
    %p166 = por %p164, %p165
    %p167 = scmp.ne.s32.totalorder %s156, %s157
    %p168 = scmp.eq.s32.totalorder %s15, 0
    %p169 = por %p167, %p168
    %p170 = scmp.ne.s32.totalorder %s156, %s157
    %p171 = scmp.eq.s32.totalorder %s16, 1
    %p172 = por %p170, %p171
    %p174 = scmp.ne.s32.totalorder %s157, %s173
    %p175 = scmp.eq.s32.totalorder %s16, 0
    %p176 = por %p174, %p175
    %p177 = scmp.le.s32.totalorder 1, %s10
    %p178 = scmp.lt.s32.totalorder %s10, 3
    %p179 = pnand %p177, %p178
    %p180 = pneg %p179
    // Predicated region
    $region9: #{_lambda_.4} parent=5 // pred_check
      _
    $region10: #{_lambda_.4} parent=5 // pred_check_branch
      %182 = sbr.rel (%p179) target = $region12
    $region11: #{_lambda_.4} parent=5 // pred_region
      %s183 = ssub.s32 %s10, 1
    $region12: #{_lambda_.4} parent=5 // pred_fallthru
      _
    %p184 = scmp.lt.s32.totalorder %s10, 2
    // Predicated region
    $region13: #{_lambda_.4} parent=5 // pred_check
      %p185 = pneg %p184
    $region14: #{_lambda_.4} parent=5 // pred_check_branch
      %187 = sbr.rel (%p185) target = $region16
    $region15: #{_lambda_.4} parent=5 // pred_region
      // Predicated region
      $region17: #{_lambda_.4} parent=15 // pred_check
        %p188 = pneg %p51
      $region18: #{_lambda_.4} parent=15 // pred_check_branch
        %190 = sbr.rel (%p188) target = $region20
      $region19: #{_lambda_.4} parent=15 // pred_region
        %p191 = scmp.lt.s32.totalorder %s17, 1
        %s192 = scalar_select %p191, %s17, 1
        %p193 = scmp.lt.s32.totalorder %s18, 0
        %s194 = scalar_select %p193, %s18, 0
        %s195 = smul.addr %s192, 4
        %s196 = sadd.s32 %s194, %s195
        %s197 = smul.addr %s196, 4
        %s198 = scalar_lea.vmem %s0, %s197
      $region20: #{_lambda_.4} parent=15 // pred_fallthru
        _
      // Predicated region
      $region21: #{_lambda_.4} parent=15 // pred_check
        %p199 = pneg %p79
      $region22: #{_lambda_.4} parent=15 // pred_check_branch
        %201 = sbr.rel (%p199) target = $region24
      $region23: #{_lambda_.4} parent=15 // pred_region
        %p202 = scmp.lt.s32.totalorder %s17, 1
        %s203 = scalar_select %p202, %s17, 1
        %p204 = scmp.lt.s32.totalorder %s19, 0
        %s205 = scalar_select %p204, %s19, 0
        %s206 = smul.addr %s203, 4
        %s207 = sadd.s32 %s205, %s206
        %s208 = sadd.s32 %s207, 8
        %s209 = smul.addr %s208, 4
        %s210 = scalar_lea.vmem %s1, %s209
      $region24: #{_lambda_.4} parent=15 // pred_fallthru
        _
      // Predicated region
      $region25: #{_lambda_.4} parent=15 // pred_check
        %p211 = pneg %p107
      $region26: #{_lambda_.4} parent=15 // pred_check_branch
        %213 = sbr.rel (%p211) target = $region28
      $region27: #{_lambda_.4} parent=15 // pred_region
        %p214 = scmp.lt.s32.totalorder %s17, 1
        %s215 = scalar_select %p214, %s17, 1
        %p216 = scmp.lt.s32.totalorder %s19, 0
        %s217 = scalar_select %p216, %s19, 0
        %s218 = smul.addr %s215, 4
        %s219 = sadd.s32 %s217, %s218
        %s220 = sadd.s32 %s219, 16
        %s221 = smul.addr %s220, 4
        %s222 = scalar_lea.vmem %s2, %s221
      $region28: #{_lambda_.4} parent=15 // pred_fallthru
        _
      // Predicated region
      $region29: #{_lambda_.4} parent=15 // pred_check
        %p223 = pneg %p135
      $region30: #{_lambda_.4} parent=15 // pred_check_branch
        %225 = sbr.rel (%p223) target = $region32
      $region31: #{_lambda_.4} parent=15 // pred_region
        %p226 = scmp.lt.s32.totalorder %s17, 1
        %s227 = scalar_select %p226, %s17, 1
        %p228 = scmp.lt.s32.totalorder %s19, 0
        %s229 = scalar_select %p228, %s19, 0
        %s230 = sadd.s32 %s229, %s227
        %s231 = scalar_lea.vmem %s3, %s230
      $region32: #{_lambda_.4} parent=15 // pred_fallthru
        _
    $region16: #{_lambda_.4} parent=5 // pred_fallthru
      _
    %p232 = scmp.le.s32.totalorder 1, %s10
    %p233 = scmp.lt.s32.totalorder %s10, 3
    %p234 = pnand %p232, %p233
    %p235 = pneg %p234
    // Predicated region
    $region33: #{_lambda_.4} parent=5 // pred_check
      _
    $region34: #{_lambda_.4} parent=5 // pred_check_branch
      %237 = sbr.rel (%p234) target = $region36
    $region35: #{_lambda_.4} parent=5 // pred_region
      %s238 = ssub.s32 %s10, 1
      %p239 = scmp.lt.s32.totalorder %s20, 1
      %s240 = scalar_select %p239, %s20, 1
      %p241 = scmp.lt.s32.totalorder %s21, 0
      %s242 = scalar_select %p241, %s21, 0
      %s243 = smul.addr %s240, 4
      %s244 = sadd.s32 %s242, %s243
      %s245 = smul.addr %s244, 4
      %s246 = scalar_lea.vmem %s0, %s245
      %p247 = pneg %p57
      %p248 = pneg %p54
      %p249 = scmp.lt.s32.totalorder %s20, 1
      %s250 = scalar_select %p249, %s20, 1
      %p251 = scmp.lt.s32.totalorder %s22, 0
      %s252 = scalar_select %p251, %s22, 0
      %s253 = smul.addr %s250, 4
      %s254 = sadd.s32 %s252, %s253
      %s255 = sadd.s32 %s254, 8
      %s256 = smul.addr %s255, 4
      %s257 = scalar_lea.vmem %s1, %s256
      %p258 = pneg %p85
      %p259 = pneg %p82
      %p260 = scmp.lt.s32.totalorder %s20, 1
      %s261 = scalar_select %p260, %s20, 1
      %p262 = scmp.lt.s32.totalorder %s22, 0
      %s263 = scalar_select %p262, %s22, 0
      %s264 = smul.addr %s261, 4
      %s265 = sadd.s32 %s263, %s264
      %s266 = sadd.s32 %s265, 16
      %s267 = smul.addr %s266, 4
      %s268 = scalar_lea.vmem %s2, %s267
      %p269 = pneg %p113
      %p270 = pneg %p110
      %p271 = scmp.lt.s32.totalorder %s20, 1
      %s272 = scalar_select %p271, %s20, 1
      %p273 = scmp.lt.s32.totalorder %s22, 0
      %s274 = scalar_select %p273, %s22, 0
      %s275 = sadd.s32 %s274, %s272
      %s276 = scalar_lea.vmem %s3, %s275
      %p277 = pneg %p141
      %p278 = pneg %p138
      %p279 = pneg %p169
      %p280 = pneg %p166
      %p281 = scmp.lt.s32.totalorder %s20, 1
      %s282 = scalar_select %p281, %s20, 1
      %p283 = scmp.lt.s32.totalorder %s21, 0
      %s284 = scalar_select %p283, %s21, 0
      %s285 = sadd.s32 %s284, %s282
      %s286 = smul.addr %s285, 4
      %s287 = scalar_lea.vmem %s4, %s286
      %p288 = scmp.lt.s32.totalorder %s20, 1
      %s289 = scalar_select %p288, %s20, 1
      %p290 = scmp.lt.s32.totalorder %s21, 0
      %s291 = scalar_select %p290, %s21, 0
      %s292 = smul.addr %s289, 4
      %s293 = sadd.s32 %s291, %s292
      %s294 = smul.addr %s293, 4
      %s295 = scalar_lea.vmem %s0, %s294
      %p296 = scmp.lt.s32.totalorder %s20, 1
      %s297 = scalar_select %p296, %s20, 1
      %p298 = scmp.lt.s32.totalorder %s22, 0
      %s299 = scalar_select %p298, %s22, 0
      %s300 = smul.addr %s297, 4
      %s301 = sadd.s32 %s299, %s300
      %s302 = sadd.s32 %s301, 8
      %s303 = smul.addr %s302, 4
      %s304 = scalar_lea.vmem %s1, %s303
      %p305 = scmp.lt.s32.totalorder %s20, 1
      %s306 = scalar_select %p305, %s20, 1
      %p307 = scmp.lt.s32.totalorder %s22, 0
      %s308 = scalar_select %p307, %s22, 0
      %s309 = smul.addr %s306, 4
      %s310 = sadd.s32 %s308, %s309
      %s311 = sadd.s32 %s310, 16
      %s312 = smul.addr %s311, 4
      %s313 = scalar_lea.vmem %s2, %s312
      %p314 = scmp.lt.s32.totalorder %s20, 1
      %s315 = scalar_select %p314, %s20, 1
      %p316 = scmp.lt.s32.totalorder %s22, 0
      %s317 = scalar_select %p316, %s22, 0
      %s318 = sadd.s32 %s317, %s315
      %s319 = scalar_lea.vmem %s3, %s318
      %p320 = scmp.lt.s32.totalorder %s20, 1
      %s321 = scalar_select %p320, %s20, 1
      %p322 = scmp.lt.s32.totalorder %s21, 0
      %s323 = scalar_select %p322, %s21, 0
      %s324 = sadd.s32 %s323, %s321
      %s325 = smul.addr %s324, 4
      %s326 = scalar_lea.vmem %s4, %s325
      %p328 = scmp.eq.s32.totalorder %s22, 0
      // Predicated region
      $region37: #{_lambda_.4} parent=35 // pred_check
        %p329 = pneg %p328
      $region38: #{_lambda_.4} parent=35 // pred_check_branch
        %331 = sbr.rel (%p329) target = $region40
      $region39: #{_lambda_.4} parent=35 // pred_region
        %vm332 = vcmask 7168
        %333 = vst.msk [vmem:[#allocation2] sm:$0xff] %vm332, -inf
        %334 = vst.msk [vmem:[#allocation2 + $0x8] sm:$0xff] %vm332, -inf
        %335 = vst.msk [vmem:[#allocation2 + $0x10] sm:$0xff] %vm332, -inf
        %336 = vst.msk [vmem:[#allocation2 + $0x18] sm:$0xff] %vm332, -inf
        %337 = vst.msk [vmem:[#allocation3] sm:$0xff] %vm332, 0.0
        %338 = vst.msk [vmem:[#allocation3 + $0x8] sm:$0xff] %vm332, 0.0
        %339 = vst.msk [vmem:[#allocation3 + $0x10] sm:$0xff] %vm332, 0.0
        %340 = vst.msk [vmem:[#allocation3 + $0x18] sm:$0xff] %vm332, 0.0
        %vm341 = vcmask 64512
        %342 = vst.msk [vmem:[#allocation4] sm:$0xff] %vm341, 0.0
        %343 = vst.msk [vmem:[#allocation4 + $0x8] sm:$0xff] %vm341, 0.0
        %344 = vst.msk [vmem:[#allocation4 + $0x10] sm:$0xff] %vm341, 0.0
        %345 = vst.msk [vmem:[#allocation4 + $0x18] sm:$0xff] %vm341, 0.0
      $region40: #{_lambda_.4} parent=35 // pred_fallthru
        _
      %v346 = vld [vmem:[%s295] sm:$0xf]
      %v347 = vld [vmem:[%s295 + $0x4] sm:$0xf]
      %v348 = vld [vmem:[%s295 + $0x8] sm:$0xf]
      %v349 = vld [vmem:[%s295 + $0xc] sm:$0xf]
      %v350 = vld [vmem:[%s304] sm:$0xf]
      %v351 = vld [vmem:[%s304 + $0x4] sm:$0xf]
      %v352 = vld [vmem:[%s304 + $0x8] sm:$0xf]
      %v353 = vld [vmem:[%s304 + $0xc] sm:$0xf]
      %v354 = vld [vmem:[%s313] sm:$0xf]
      %v355 = vld [vmem:[%s313 + $0x4] sm:$0xf]
      %v356 = vld [vmem:[%s313 + $0x8] sm:$0xf]
      %v357 = vld [vmem:[%s313 + $0xc] sm:$0xf]
      %v358 = vld [vmem:[%s319] sm:$0x1]
      %v360 = vlaneseq
      %v361 = vshrl.u32 %v360, 7
      %v362 = vsub.s32 0, %v361
      %v363 = vrot.slane %v358, %v362
      %vm365 = vcmask 64512
      %v367 = vsel %vm365, %v346, 0
      %v370 = vsel %vm365, %v350, 0
      %372 = vmatprep.subr.bf16.mxu0 0
      %373 = vmatpush1.bf16.xpose.msra.mxu0 %v370
      %374 = vmatprep.subr.bf16.mxu0 0
      %375 = vmatpush1.bf16.xpose.msra.mxu0 0
      %376 = vmatprep.subr.bf16.mxu0 0
      %377 = vmatpush1.bf16.xpose.msra.mxu0 0
      %378 = vmatprep.subr.bf16.mxu0 0
      %379 = vmatpush1.bf16.xpose.msra.mxu0 0
      %380 = vmatprep.subr.bf16.mxu0 0
      %381 = vmatpush1.bf16.xpose.msra.mxu0 0
      %382 = vmatprep.subr.bf16.mxu0 0
      %383 = vmatpush1.bf16.xpose.msra.mxu0 0
      %384 = vmatprep.subr.bf16.mxu0 0
      %385 = vmatpush1.bf16.xpose.msra.mxu0 0
      %386 = vmatprep.subr.bf16.mxu0 0
      %387 = vmatpush1.bf16.xpose.msra.mxu0 0
      %388 = vmatprep.subr.bf16.mxu0 0
      %389 = vmatpush1.bf16.xpose.msra.mxu0 0
      %390 = vmatprep.subr.bf16.mxu0 0
      %391 = vmatpush1.bf16.xpose.msra.mxu0 0
      %392 = vmatprep.subr.bf16.mxu0 0
      %393 = vmatpush1.bf16.xpose.msra.mxu0 0
      %394 = vmatprep.subr.bf16.mxu0 0
      %395 = vmatpush1.bf16.xpose.msra.mxu0 0
      %396 = vmatprep.subr.bf16.mxu0 0
      %397 = vmatpush1.bf16.xpose.msra.mxu0 0
      %398 = vmatprep.subr.bf16.mxu0 0
      %399 = vmatpush1.bf16.xpose.msra.mxu0 0
      %400 = vmatprep.subr.bf16.mxu0 0
      %401 = vmatpush1.bf16.xpose.msra.mxu0 0
      %402 = vmatprep.subr.bf16.mxu0 0
      %403 = vmatpush1.bf16.xpose.msra.mxu0 0
      %404 = vmatprep.mubr.bf16.mxu0 0
      %405 = vmatmul.mubr.bf16.gmra.mrb[0].mxu0 %v367
      %v406 = vpop.f32.mrb[0].mxu0
      %v407 = vadd.f32 %v363, %v406
      %v408 = vpop.f32.mrb[0].mxu0
      %v409 = vpop.f32.mrb[0].mxu0
      %v410 = vpop.f32.mrb[0].mxu0
      %411 = vdwg.mxu0
      %v413 = vsel %vm365, %v347, 0
      %v416 = vsel %vm365, %v351, 0
      %418 = vmatprep.subr.bf16.mxu0 0
      %419 = vmatpush1.bf16.xpose.msra.mxu0 %v416
      %420 = vmatprep.subr.bf16.mxu0 0
      %421 = vmatpush1.bf16.xpose.msra.mxu0 0
      %422 = vmatprep.subr.bf16.mxu0 0
      %423 = vmatpush1.bf16.xpose.msra.mxu0 0
      %424 = vmatprep.subr.bf16.mxu0 0
      %425 = vmatpush1.bf16.xpose.msra.mxu0 0
      %426 = vmatprep.subr.bf16.mxu0 0
      %427 = vmatpush1.bf16.xpose.msra.mxu0 0
      %428 = vmatprep.subr.bf16.mxu0 0
      %429 = vmatpush1.bf16.xpose.msra.mxu0 0
      %430 = vmatprep.subr.bf16.mxu0 0
      %431 = vmatpush1.bf16.xpose.msra.mxu0 0
      %432 = vmatprep.subr.bf16.mxu0 0
      %433 = vmatpush1.bf16.xpose.msra.mxu0 0
      %434 = vmatprep.subr.bf16.mxu0 0
      %435 = vmatpush1.bf16.xpose.msra.mxu0 0
      %436 = vmatprep.subr.bf16.mxu0 0
      %437 = vmatpush1.bf16.xpose.msra.mxu0 0
      %438 = vmatprep.subr.bf16.mxu0 0
      %439 = vmatpush1.bf16.xpose.msra.mxu0 0
      %440 = vmatprep.subr.bf16.mxu0 0
      %441 = vmatpush1.bf16.xpose.msra.mxu0 0
      %442 = vmatprep.subr.bf16.mxu0 0
      %443 = vmatpush1.bf16.xpose.msra.mxu0 0
      %444 = vmatprep.subr.bf16.mxu0 0
      %445 = vmatpush1.bf16.xpose.msra.mxu0 0
      %446 = vmatprep.subr.bf16.mxu0 0
      %447 = vmatpush1.bf16.xpose.msra.mxu0 0
      %448 = vmatprep.subr.bf16.mxu0 0
      %449 = vmatpush1.bf16.xpose.msra.mxu0 0
      %450 = vmatprep.mubr.bf16.mxu0 0
      %451 = vmatmul.mubr.bf16.gmra.mrb[0].mxu0 %v413
      %v452 = vpop.f32.mrb[0].mxu0
      %v453 = vadd.f32 %v363, %v452
      %v454 = vpop.f32.mrb[0].mxu0
      %v455 = vpop.f32.mrb[0].mxu0
      %v456 = vpop.f32.mrb[0].mxu0
      %457 = vdwg.mxu0
      %v459 = vsel %vm365, %v348, 0
      %v462 = vsel %vm365, %v352, 0
      %464 = vmatprep.subr.bf16.mxu0 0
      %465 = vmatpush1.bf16.xpose.msra.mxu0 %v462
      %466 = vmatprep.subr.bf16.mxu0 0
      %467 = vmatpush1.bf16.xpose.msra.mxu0 0
      %468 = vmatprep.subr.bf16.mxu0 0
      %469 = vmatpush1.bf16.xpose.msra.mxu0 0
      %470 = vmatprep.subr.bf16.mxu0 0
      %471 = vmatpush1.bf16.xpose.msra.mxu0 0
      %472 = vmatprep.subr.bf16.mxu0 0
      %473 = vmatpush1.bf16.xpose.msra.mxu0 0
      %474 = vmatprep.subr.bf16.mxu0 0
      %475 = vmatpush1.bf16.xpose.msra.mxu0 0
      %476 = vmatprep.subr.bf16.mxu0 0
      %477 = vmatpush1.bf16.xpose.msra.mxu0 0
      %478 = vmatprep.subr.bf16.mxu0 0
      %479 = vmatpush1.bf16.xpose.msra.mxu0 0
      %480 = vmatprep.subr.bf16.mxu0 0
      %481 = vmatpush1.bf16.xpose.msra.mxu0 0
      %482 = vmatprep.subr.bf16.mxu0 0
      %483 = vmatpush1.bf16.xpose.msra.mxu0 0
      %484 = vmatprep.subr.bf16.mxu0 0
      %485 = vmatpush1.bf16.xpose.msra.mxu0 0
      %486 = vmatprep.subr.bf16.mxu0 0
      %487 = vmatpush1.bf16.xpose.msra.mxu0 0
      %488 = vmatprep.subr.bf16.mxu0 0
      %489 = vmatpush1.bf16.xpose.msra.mxu0 0
      %490 = vmatprep.subr.bf16.mxu0 0
      %491 = vmatpush1.bf16.xpose.msra.mxu0 0
      %492 = vmatprep.subr.bf16.mxu0 0
      %493 = vmatpush1.bf16.xpose.msra.mxu0 0
      %494 = vmatprep.subr.bf16.mxu0 0
      %495 = vmatpush1.bf16.xpose.msra.mxu0 0
      %496 = vmatprep.mubr.bf16.mxu0 0
      %497 = vmatmul.mubr.bf16.gmra.mrb[0].mxu0 %v459
      %v498 = vpop.f32.mrb[0].mxu0
      %v499 = vadd.f32 %v363, %v498
      %v500 = vpop.f32.mrb[0].mxu0
      %v501 = vpop.f32.mrb[0].mxu0
      %v502 = vpop.f32.mrb[0].mxu0
      %503 = vdwg.mxu0
      %v505 = vsel %vm365, %v349, 0
      %v508 = vsel %vm365, %v353, 0
      %510 = vmatprep.subr.bf16.mxu0 0
      %511 = vmatpush1.bf16.xpose.msra.mxu0 %v508
      %512 = vmatprep.subr.bf16.mxu0 0
      %513 = vmatpush1.bf16.xpose.msra.mxu0 0
      %514 = vmatprep.subr.bf16.mxu0 0
      %515 = vmatpush1.bf16.xpose.msra.mxu0 0
      %516 = vmatprep.subr.bf16.mxu0 0
      %517 = vmatpush1.bf16.xpose.msra.mxu0 0
      %518 = vmatprep.subr.bf16.mxu0 0
      %519 = vmatpush1.bf16.xpose.msra.mxu0 0
      %520 = vmatprep.subr.bf16.mxu0 0
      %521 = vmatpush1.bf16.xpose.msra.mxu0 0
      %522 = vmatprep.subr.bf16.mxu0 0
      %523 = vmatpush1.bf16.xpose.msra.mxu0 0
      %524 = vmatprep.subr.bf16.mxu0 0
      %525 = vmatpush1.bf16.xpose.msra.mxu0 0
      %526 = vmatprep.subr.bf16.mxu0 0
      %527 = vmatpush1.bf16.xpose.msra.mxu0 0
      %528 = vmatprep.subr.bf16.mxu0 0
      %529 = vmatpush1.bf16.xpose.msra.mxu0 0
      %530 = vmatprep.subr.bf16.mxu0 0
      %531 = vmatpush1.bf16.xpose.msra.mxu0 0
      %532 = vmatprep.subr.bf16.mxu0 0
      %533 = vmatpush1.bf16.xpose.msra.mxu0 0
      %534 = vmatprep.subr.bf16.mxu0 0
      %535 = vmatpush1.bf16.xpose.msra.mxu0 0
      %536 = vmatprep.subr.bf16.mxu0 0
      %537 = vmatpush1.bf16.xpose.msra.mxu0 0
      %538 = vmatprep.subr.bf16.mxu0 0
      %539 = vmatpush1.bf16.xpose.msra.mxu0 0
      %540 = vmatprep.subr.bf16.mxu0 0
      %541 = vmatpush1.bf16.xpose.msra.mxu0 0
      %542 = vmatprep.mubr.bf16.mxu0 0
      %543 = vmatmul.mubr.bf16.gmra.mrb[0].mxu0 %v505
      %v544 = vpop.f32.mrb[0].mxu0
      %v545 = vadd.f32 %v363, %v544
      %v546 = vpop.f32.mrb[0].mxu0
      %v547 = vpop.f32.mrb[0].mxu0
      %v548 = vpop.f32.mrb[0].mxu0
      %549 = vdwg.mxu0
      %v550 = vld [vmem:[#allocation2] sm:$0xff]
      %v551 = vld [vmem:[#allocation2 + $0x8] sm:$0xff]
      %v552 = vld [vmem:[#allocation2 + $0x10] sm:$0xff]
      %v553 = vld [vmem:[#allocation2 + $0x18] sm:$0xff]
      %v554 = vsel %vm365, %v407, -inf
      %555 = vmax.xlane.f32.xlu0 %v554
      %v556 = vpop.xlane.xlu0 %555
      %v557 = vsel %vm365, %v453, -inf
      %558 = vmax.xlane.f32.xlu0 %v557
      %v559 = vpop.xlane.xlu0 %558
      %v560 = vsel %vm365, %v499, -inf
      %561 = vmax.xlane.f32.xlu0 %v560
      %v562 = vpop.xlane.xlu0 %561
      %v563 = vsel %vm365, %v545, -inf
      %564 = vmax.xlane.f32.xlu0 %v563
      %v565 = vpop.xlane.xlu0 %564
      %v566 = vmax.f32 %v550, %v556
      %v567 = vmax.f32 %v551, %v559
      %v568 = vmax.f32 %v552, %v562
      %v569 = vmax.f32 %v553, %v565
      %v570 = vsub.f32 %v550, %v566
      %v571 = vsub.f32 %v551, %v567
      %v572 = vsub.f32 %v552, %v568
      %v573 = vsub.f32 %v553, %v569
      %v574 = vmul.f32 %v570, 1.442695
      %v575 = vpow.pop %v574
      %v576 = vmul.f32 %v571, 1.442695
      %v577 = vpow.pop %v576
      %v578 = vmul.f32 %v572, 1.442695
      %v579 = vpow.pop %v578
      %v580 = vmul.f32 %v573, 1.442695
      %v581 = vpow.pop %v580
      %583 = vset.pattern.permute.xlu0 0
      %584 = vperm.xlu0 %583, %v566
      %v585 = vpop.permute.xlu0 %584
      %588 = vset.pattern.permute.xlu0 0
      %589 = vperm.xlu0 %588, %v567
      %v590 = vpop.permute.xlu0 %589
      %593 = vset.pattern.permute.xlu0 0
      %594 = vperm.xlu0 %593, %v568
      %v595 = vpop.permute.xlu0 %594
      %598 = vset.pattern.permute.xlu0 0
      %599 = vperm.xlu0 %598, %v569
      %v600 = vpop.permute.xlu0 %599
      %v602 = vsub.f32 %v407, %v585
      %v603 = vsub.f32 %v453, %v590
      %v604 = vsub.f32 %v499, %v595
      %v605 = vsub.f32 %v545, %v600
      %v606 = vmul.f32 %v602, 1.442695
      %v607 = vpow.pop %v606
      %v608 = vmul.f32 %v603, 1.442695
      %v609 = vpow.pop %v608
      %v610 = vmul.f32 %v604, 1.442695
      %v611 = vpow.pop %v610
      %v612 = vmul.f32 %v605, 1.442695
      %v613 = vpow.pop %v612
      %v614 = vld [vmem:[#allocation3] sm:$0xff]
      %v615 = vld [vmem:[#allocation3 + $0x8] sm:$0xff]
      %v616 = vld [vmem:[#allocation3 + $0x10] sm:$0xff]
      %v617 = vld [vmem:[#allocation3 + $0x18] sm:$0xff]
      %v618 = vmul.f32 %v575, %v614
      %v619 = vmul.f32 %v577, %v615
      %v620 = vmul.f32 %v579, %v616
      %v621 = vmul.f32 %v581, %v617
      %v622 = vsel %vm365, %v607, 0.0
      %623 = vadd.xlane.f32.xlu0 %v622
      %v624 = vpop.xlane.xlu0 %623
      %v625 = vsel %vm365, %v609, 0.0
      %626 = vadd.xlane.f32.xlu0 %v625
      %v627 = vpop.xlane.xlu0 %626
      %v628 = vsel %vm365, %v611, 0.0
      %629 = vadd.xlane.f32.xlu0 %v628
      %v630 = vpop.xlane.xlu0 %629
      %v631 = vsel %vm365, %v613, 0.0
      %632 = vadd.xlane.f32.xlu0 %v631
      %v633 = vpop.xlane.xlu0 %632
      %v634 = vadd.f32 %v618, %v624
      %v635 = vadd.f32 %v619, %v627
      %v636 = vadd.f32 %v620, %v630
      %v637 = vadd.f32 %v621, %v633
      %vm638 = vcmask 7168
      %639 = vst.msk [vmem:[#allocation3] sm:$0xff] %vm638, %v634
      %640 = vst.msk [vmem:[#allocation3 + $0x8] sm:$0xff] %vm638, %v635
      %641 = vst.msk [vmem:[#allocation3 + $0x10] sm:$0xff] %vm638, %v636
      %642 = vst.msk [vmem:[#allocation3 + $0x18] sm:$0xff] %vm638, %v637
      %v643 = vpack.c.bf16 %v607, %v607
      %v644 = vpack.c.bf16 %v609, %v609
      %v645 = vpack.c.bf16 %v611, %v611
      %v646 = vpack.c.bf16 %v613, %v613
      %v648 = vsel %vm365, %v643, 0
      %vm650 = vcmask 1043456
      %v652 = vsel %vm650, %v354, 0
      %654 = vmatprep.subr.bf16.mxu0 0
      %655 = vmatpush1.bf16.msra.mxu0 %v652
      %656 = vmatprep.subr.bf16.mxu0 0
      %657 = vmatpush1.bf16.msra.mxu0 0
      %658 = vmatprep.subr.bf16.mxu0 0
      %659 = vmatpush1.bf16.msra.mxu0 0
      %660 = vmatprep.subr.bf16.mxu0 0
      %661 = vmatpush1.bf16.msra.mxu0 0
      %662 = vmatprep.subr.bf16.mxu0 0
      %663 = vmatpush1.bf16.msra.mxu0 0
      %664 = vmatprep.subr.bf16.mxu0 0
      %665 = vmatpush1.bf16.msra.mxu0 0
      %666 = vmatprep.subr.bf16.mxu0 0
      %667 = vmatpush1.bf16.msra.mxu0 0
      %668 = vmatprep.subr.bf16.mxu0 0
      %669 = vmatpush1.bf16.msra.mxu0 0
      %670 = vmatprep.subr.bf16.mxu0 0
      %671 = vmatpush1.bf16.msra.mxu0 0
      %672 = vmatprep.subr.bf16.mxu0 0
      %673 = vmatpush1.bf16.msra.mxu0 0
      %674 = vmatprep.subr.bf16.mxu0 0
      %675 = vmatpush1.bf16.msra.mxu0 0
      %676 = vmatprep.subr.bf16.mxu0 0
      %677 = vmatpush1.bf16.msra.mxu0 0
      %678 = vmatprep.subr.bf16.mxu0 0
      %679 = vmatpush1.bf16.msra.mxu0 0
      %680 = vmatprep.subr.bf16.mxu0 0
      %681 = vmatpush1.bf16.msra.mxu0 0
      %682 = vmatprep.subr.bf16.mxu0 0
      %683 = vmatpush1.bf16.msra.mxu0 0
      %684 = vmatprep.subr.bf16.mxu0 0
      %685 = vmatpush1.bf16.msra.mxu0 0
      %686 = vmatprep.mubr.bf16.mxu0 0
      %687 = vmatmul.mubr.bf16.gmra.mrb[0].mxu0 %v648
      %v688 = vpop.f32.mrb[0].mxu0
      %v689 = vadd.f32 0.0, %v688
      %v690 = vpop.f32.mrb[0].mxu0
      %v691 = vpop.f32.mrb[0].mxu0
      %v692 = vpop.f32.mrb[0].mxu0
      %693 = vdwg.mxu0
      %v695 = vsel %vm365, %v644, 0
      %v698 = vsel %vm650, %v355, 0
      %700 = vmatprep.subr.bf16.mxu0 0
      %701 = vmatpush1.bf16.msra.mxu0 %v698
      %702 = vmatprep.subr.bf16.mxu0 0
      %703 = vmatpush1.bf16.msra.mxu0 0
      %704 = vmatprep.subr.bf16.mxu0 0
      %705 = vmatpush1.bf16.msra.mxu0 0
      %706 = vmatprep.subr.bf16.mxu0 0
      %707 = vmatpush1.bf16.msra.mxu0 0
      %708 = vmatprep.subr.bf16.mxu0 0
      %709 = vmatpush1.bf16.msra.mxu0 0
      %710 = vmatprep.subr.bf16.mxu0 0
      %711 = vmatpush1.bf16.msra.mxu0 0
      %712 = vmatprep.subr.bf16.mxu0 0
      %713 = vmatpush1.bf16.msra.mxu0 0
      %714 = vmatprep.subr.bf16.mxu0 0
      %715 = vmatpush1.bf16.msra.mxu0 0
      %716 = vmatprep.subr.bf16.mxu0 0
      %717 = vmatpush1.bf16.msra.mxu0 0
      %718 = vmatprep.subr.bf16.mxu0 0
      %719 = vmatpush1.bf16.msra.mxu0 0
      %720 = vmatprep.subr.bf16.mxu0 0
      %721 = vmatpush1.bf16.msra.mxu0 0
      %722 = vmatprep.subr.bf16.mxu0 0
      %723 = vmatpush1.bf16.msra.mxu0 0
      %724 = vmatprep.subr.bf16.mxu0 0
      %725 = vmatpush1.bf16.msra.mxu0 0
      %726 = vmatprep.subr.bf16.mxu0 0
      %727 = vmatpush1.bf16.msra.mxu0 0
      %728 = vmatprep.subr.bf16.mxu0 0
      %729 = vmatpush1.bf16.msra.mxu0 0
      %730 = vmatprep.subr.bf16.mxu0 0
      %731 = vmatpush1.bf16.msra.mxu0 0
      %732 = vmatprep.mubr.bf16.mxu0 0
      %733 = vmatmul.mubr.bf16.gmra.mrb[0].mxu0 %v695
      %v734 = vpop.f32.mrb[0].mxu0
      %v735 = vadd.f32 0.0, %v734
      %v736 = vpop.f32.mrb[0].mxu0
      %v737 = vpop.f32.mrb[0].mxu0
      %v738 = vpop.f32.mrb[0].mxu0
      %739 = vdwg.mxu0
      %v741 = vsel %vm365, %v645, 0
      %v744 = vsel %vm650, %v356, 0
      %746 = vmatprep.subr.bf16.mxu0 0
      %747 = vmatpush1.bf16.msra.mxu0 %v744
      %748 = vmatprep.subr.bf16.mxu0 0
      %749 = vmatpush1.bf16.msra.mxu0 0
      %750 = vmatprep.subr.bf16.mxu0 0
      %751 = vmatpush1.bf16.msra.mxu0 0
      %752 = vmatprep.subr.bf16.mxu0 0
      %753 = vmatpush1.bf16.msra.mxu0 0
      %754 = vmatprep.subr.bf16.mxu0 0
      %755 = vmatpush1.bf16.msra.mxu0 0
      %756 = vmatprep.subr.bf16.mxu0 0
      %757 = vmatpush1.bf16.msra.mxu0 0
      %758 = vmatprep.subr.bf16.mxu0 0
      %759 = vmatpush1.bf16.msra.mxu0 0
      %760 = vmatprep.subr.bf16.mxu0 0
      %761 = vmatpush1.bf16.msra.mxu0 0
      %762 = vmatprep.subr.bf16.mxu0 0
      %763 = vmatpush1.bf16.msra.mxu0 0
      %764 = vmatprep.subr.bf16.mxu0 0
      %765 = vmatpush1.bf16.msra.mxu0 0
      %766 = vmatprep.subr.bf16.mxu0 0
      %767 = vmatpush1.bf16.msra.mxu0 0
      %768 = vmatprep.subr.bf16.mxu0 0
      %769 = vmatpush1.bf16.msra.mxu0 0
      %770 = vmatprep.subr.bf16.mxu0 0
      %771 = vmatpush1.bf16.msra.mxu0 0
      %772 = vmatprep.subr.bf16.mxu0 0
      %773 = vmatpush1.bf16.msra.mxu0 0
      %774 = vmatprep.subr.bf16.mxu0 0
      %775 = vmatpush1.bf16.msra.mxu0 0
      %776 = vmatprep.subr.bf16.mxu0 0
      %777 = vmatpush1.bf16.msra.mxu0 0
      %778 = vmatprep.mubr.bf16.mxu0 0
      %779 = vmatmul.mubr.bf16.gmra.mrb[0].mxu0 %v741
      %v780 = vpop.f32.mrb[0].mxu0
      %v781 = vadd.f32 0.0, %v780
      %v782 = vpop.f32.mrb[0].mxu0
      %v783 = vpop.f32.mrb[0].mxu0
      %v784 = vpop.f32.mrb[0].mxu0
      %785 = vdwg.mxu0
      %v787 = vsel %vm365, %v646, 0
      %v790 = vsel %vm650, %v357, 0
      %792 = vmatprep.subr.bf16.mxu0 0
      %793 = vmatpush1.bf16.msra.mxu0 %v790
      %794 = vmatprep.subr.bf16.mxu0 0
      %795 = vmatpush1.bf16.msra.mxu0 0
      %796 = vmatprep.subr.bf16.mxu0 0
      %797 = vmatpush1.bf16.msra.mxu0 0
      %798 = vmatprep.subr.bf16.mxu0 0
      %799 = vmatpush1.bf16.msra.mxu0 0
      %800 = vmatprep.subr.bf16.mxu0 0
      %801 = vmatpush1.bf16.msra.mxu0 0
      %802 = vmatprep.subr.bf16.mxu0 0
      %803 = vmatpush1.bf16.msra.mxu0 0
      %804 = vmatprep.subr.bf16.mxu0 0
      %805 = vmatpush1.bf16.msra.mxu0 0
      %806 = vmatprep.subr.bf16.mxu0 0
      %807 = vmatpush1.bf16.msra.mxu0 0
      %808 = vmatprep.subr.bf16.mxu0 0
      %809 = vmatpush1.bf16.msra.mxu0 0
      %810 = vmatprep.subr.bf16.mxu0 0
      %811 = vmatpush1.bf16.msra.mxu0 0
      %812 = vmatprep.subr.bf16.mxu0 0
      %813 = vmatpush1.bf16.msra.mxu0 0
      %814 = vmatprep.subr.bf16.mxu0 0
      %815 = vmatpush1.bf16.msra.mxu0 0
      %816 = vmatprep.subr.bf16.mxu0 0
      %817 = vmatpush1.bf16.msra.mxu0 0
      %818 = vmatprep.subr.bf16.mxu0 0
      %819 = vmatpush1.bf16.msra.mxu0 0
      %820 = vmatprep.subr.bf16.mxu0 0
      %821 = vmatpush1.bf16.msra.mxu0 0
      %822 = vmatprep.subr.bf16.mxu0 0
      %823 = vmatpush1.bf16.msra.mxu0 0
      %824 = vmatprep.mubr.bf16.mxu0 0
      %825 = vmatmul.mubr.bf16.gmra.mrb[0].mxu0 %v787
      %v826 = vpop.f32.mrb[0].mxu0
      %v827 = vadd.f32 0.0, %v826
      %v828 = vpop.f32.mrb[0].mxu0
      %v829 = vpop.f32.mrb[0].mxu0
      %v830 = vpop.f32.mrb[0].mxu0
      %831 = vdwg.mxu0
      %v832 = vld [vmem:[#allocation4] sm:$0xff]
      %v833 = vld [vmem:[#allocation4 + $0x8] sm:$0xff]
      %v834 = vld [vmem:[#allocation4 + $0x10] sm:$0xff]
      %v835 = vld [vmem:[#allocation4 + $0x18] sm:$0xff]
      %837 = vset.pattern.permute.xlu0 0
      %838 = vperm.xlu0 %837, %v575
      %v839 = vpop.permute.xlu0 %838
      %842 = vset.pattern.permute.xlu0 0
      %843 = vperm.xlu0 %842, %v577
      %v844 = vpop.permute.xlu0 %843
      %847 = vset.pattern.permute.xlu0 0
      %848 = vperm.xlu0 %847, %v579
      %v849 = vpop.permute.xlu0 %848
      %852 = vset.pattern.permute.xlu0 0
      %853 = vperm.xlu0 %852, %v581
      %v854 = vpop.permute.xlu0 %853
      %v856 = vmul.f32 %v839, %v832
      %v857 = vmul.f32 %v844, %v833
      %v858 = vmul.f32 %v849, %v834
      %v859 = vmul.f32 %v854, %v835
      %v860 = vadd.f32 %v856, %v689
      %v861 = vadd.f32 %v857, %v735
      %v862 = vadd.f32 %v858, %v781
      %v863 = vadd.f32 %v859, %v827
      %864 = vst.msk [vmem:[#allocation4] sm:$0xff] %vm365, %v860
      %865 = vst.msk [vmem:[#allocation4 + $0x8] sm:$0xff] %vm365, %v861
      %866 = vst.msk [vmem:[#allocation4 + $0x10] sm:$0xff] %vm365, %v862
      %867 = vst.msk [vmem:[#allocation4 + $0x18] sm:$0xff] %vm365, %v863
      %868 = vst.msk [vmem:[#allocation2] sm:$0xff] %vm638, %v566
      %869 = vst.msk [vmem:[#allocation2 + $0x8] sm:$0xff] %vm638, %v567
      %870 = vst.msk [vmem:[#allocation2 + $0x10] sm:$0xff] %vm638, %v568
      %871 = vst.msk [vmem:[#allocation2 + $0x18] sm:$0xff] %vm638, %v569
      // Predicated region
      $region41: #{_lambda_.4} parent=35 // pred_check
        %p872 = pneg %p328
      $region42: #{_lambda_.4} parent=35 // pred_check_branch
        %874 = sbr.rel (%p872) target = $region44
      $region43: #{_lambda_.4} parent=35 // pred_region
        %v875 = vld [vmem:[#allocation3] sm:$0xff]
        %v876 = vld [vmem:[#allocation3 + $0x8] sm:$0xff]
        %v877 = vld [vmem:[#allocation3 + $0x10] sm:$0xff]
        %v878 = vld [vmem:[#allocation3 + $0x18] sm:$0xff]
        %v879 = vrcp.pop %v875
        %v880 = vrcp.pop %v876
        %v881 = vrcp.pop %v877
        %v882 = vrcp.pop %v878
        %v883 = vld [vmem:[#allocation4] sm:$0xff]
        %v884 = vld [vmem:[#allocation4 + $0x8] sm:$0xff]
        %v885 = vld [vmem:[#allocation4 + $0x10] sm:$0xff]
        %v886 = vld [vmem:[#allocation4 + $0x18] sm:$0xff]
        %888 = vset.pattern.permute.xlu0 0
        %889 = vperm.xlu0 %888, %v879
        %v890 = vpop.permute.xlu0 %889
        %893 = vset.pattern.permute.xlu0 0
        %894 = vperm.xlu0 %893, %v880
        %v895 = vpop.permute.xlu0 %894
        %898 = vset.pattern.permute.xlu0 0
        %899 = vperm.xlu0 %898, %v881
        %v900 = vpop.permute.xlu0 %899
        %903 = vset.pattern.permute.xlu0 0
        %904 = vperm.xlu0 %903, %v882
        %v905 = vpop.permute.xlu0 %904
        %v907 = vmul.f32 %v883, %v890
        %v908 = vmul.f32 %v884, %v895
        %v909 = vmul.f32 %v885, %v900
        %v910 = vmul.f32 %v886, %v905
        %v911 = vpack.c.bf16 %v907, %v907
        %vm912 = vcmask 60416
        %913 = vst.msk [vmem:[%s326] sm:$0xf] %vm912, %v911
        %v914 = vpack.c.bf16 %v908, %v908
        %v916 = vunpack.c.l.b16 %v914
        %v917 = vpack.c.b16 %v916, %v916
        %918 = vrot.lane.b32.xlu0 %v917, 8
        %v919 = vpop.permute.xlu0 %918
        %vm921 = vcmask 126016
        %922 = vst.msk [vmem:[%s326] sm:$0xf] %vm921, %v919
        %v923 = vpack.c.bf16 %v909, %v909
        %v925 = vunpack.c.l.b16 %v923
        %v926 = vpack.c.b16 %v925, %v925
        %927 = vrot.lane.b32.xlu0 %v926, 16
        %v928 = vpop.permute.xlu0 %927
        %vm930 = vcmask 191616
        %931 = vst.msk [vmem:[%s326] sm:$0xf] %vm930, %v928
        %v932 = vpack.c.bf16 %v910, %v910
        %v934 = vunpack.c.l.b16 %v932
        %v935 = vpack.c.b16 %v934, %v934
        %936 = vrot.lane.b32.xlu0 %v935, 24
        %v937 = vpop.permute.xlu0 %936
        %vm939 = vcmask 257216
        %940 = vst.msk [vmem:[%s326] sm:$0xf] %vm939, %v937
      $region44: #{_lambda_.4} parent=35 // pred_fallthru
        _
      %p941 = scmp.lt.s32.totalorder %s20, 1
      %s942 = scalar_select %p941, %s20, 1
      %p943 = scmp.lt.s32.totalorder %s21, 0
      %s944 = scalar_select %p943, %s21, 0
      %s945 = sadd.s32 %s944, %s942
      %s946 = smul.addr %s945, 4
      %s947 = scalar_lea.vmem %s4, %s946
      // Predicated region
      $region45: #{_lambda_.4} parent=35 // pred_check
        %p948 = pneg %p166
      $region46: #{_lambda_.4} parent=35 // pred_check_branch
        %950 = sbr.rel (%p948) target = $region48
      $region47: #{_lambda_.4} parent=35 // pred_region
        _
      $region48: #{_lambda_.4} parent=35 // pred_fallthru
        _
    $region36: #{_lambda_.4} parent=5 // pred_fallthru
      _
    %p951 = scmp.le.s32.totalorder 2, %s10
    // Predicated region
    $region49: #{_lambda_.4} parent=5 // pred_check
      %p952 = pneg %p951
    $region50: #{_lambda_.4} parent=5 // pred_check_branch
      %954 = sbr.rel (%p952) target = $region52
    $region51: #{_lambda_.4} parent=5 // pred_region
      %s955 = ssub.s32 %s10, 2
      // Predicated region
      $region53: #{_lambda_.4} parent=51 // pred_check
        %p956 = pneg %p172
      $region54: #{_lambda_.4} parent=51 // pred_check_branch
        %958 = sbr.rel (%p956) target = $region56
      $region55: #{_lambda_.4} parent=51 // pred_region
        %p959 = scmp.lt.s32.totalorder %s23, 1
        %s960 = scalar_select %p959, %s23, 1
        %p961 = scmp.lt.s32.totalorder %s24, 0
        %s962 = scalar_select %p961, %s24, 0
        %s963 = sadd.s32 %s962, %s960
        %s964 = smul.addr %s963, 4
        %s965 = scalar_lea.vmem %s4, %s964
      $region56: #{_lambda_.4} parent=51 // pred_fallthru
        _
    $region52: #{_lambda_.4} parent=5 // pred_fallthru
      _
  $region6: #{_lambda_.4} parent=0 // loop_footer
    %s14 = sadd.s32 1, %s10
  $region7: #{_lambda_.4} parent=0 // loop_footer_branch
    %9 = sbr.rel target = $region3
  $region8: #{_lambda_.4} parent=0 // loop_exit
    _

</llo_original>
